<compile_context>
chip_gen: v5e
topology: v5e:2x2
jax: 0.10.0
libtpu: 0.0.40
codegen_flags: <defaults>
</compile_context>

<pallas_src>
import math

import jax
import jax.numpy as jnp
from jax import lax
from jax.experimental import pallas as pl
from jax.experimental.pallas import tpu as pltpu

D_MODEL = 64
CTX_LENGTH = 64
NUM_HEAD = 4
HEAD_SIZE = D_MODEL // NUM_HEAD      # 16
FF_DIM = 4 * D_MODEL                 # 256
LN_EPS = 1e-5
NEG_INF = -1e30                      # finite mask value (NaN-safe even for fully-masked rows)


def _layernorm_f32(x, gamma, beta):
    mu = jnp.mean(x, axis=-1, keepdims=True)
    xc = x - mu
    var = jnp.mean(xc * xc, axis=-1, keepdims=True)
    return xc * lax.rsqrt(var + LN_EPS) * gamma + beta


def _transformer_block_kernel(
    x_ref, ln1w_ref, ln1b_ref, wqkv_ref, wo_ref, bo_ref,
    ln2w_ref, ln2b_ref, w1_ref, b1_ref, w2_ref, b2_ref, o_ref,
):
    bt, t, d = x_ref.shape
    rows = bt * t

    x = x_ref[...].astype(jnp.float32).reshape(rows, d)        # (rows, D) f32

    # ---------------- LayerNorm 1 (f32 VPU math) ----------------
    xn1 = _layernorm_f32(x, ln1w_ref[...], ln1b_ref[...])

    # ------ fused QKV projection: one (rows, 64) @ (64, 192) matmul ------
    qkv = jnp.dot(xn1.astype(jnp.bfloat16), wqkv_ref[...],
                  preferred_element_type=jnp.float32)          # (rows, 3D) f32

    scale = 1.0 / math.sqrt(HEAD_SIZE)
    q = (qkv[:, 0:d] * scale).astype(jnp.bfloat16).reshape(bt, t, d)
    k = qkv[:, d:2 * d].astype(jnp.bfloat16).reshape(bt, t, d)
    v = qkv[:, 2 * d:3 * d].astype(jnp.bfloat16).reshape(bt, t, d)

    # Causal mask, shared across heads / batch tile.
    row_id = lax.broadcasted_iota(jnp.int32, (t, t), 0)
    col_id = lax.broadcasted_iota(jnp.int32, (t, t), 1)
    causal = col_id <= row_id                                  # (T, T)

    # ---------------- per-head attention, batched over the tile ----------------
    head_outs = []
    for h in range(NUM_HEAD):                                  # static 4-way loop
        sl = slice(h * HEAD_SIZE, (h + 1) * HEAD_SIZE)
        qh, kh, vh = q[:, :, sl], k[:, :, sl], v[:, :, sl]     # (BT, T, HS) bf16
        # Q @ K^T without materializing a transpose of K.
        s = jnp.einsum('bqd,bkd->bqk', qh, kh,
                       preferred_element_type=jnp.float32)     # (BT, T, T) f32
        s = jnp.where(causal, s, NEG_INF)
        s = s - jnp.max(s, axis=-1, keepdims=True)
        p = jnp.exp(s)
        p = p * pl.reciprocal(jnp.sum(p, axis=-1, keepdims=True), approx=True)
        head_outs.append(
            jnp.einsum('bqk,bkd->bqd', p.astype(jnp.bfloat16), vh,
                       preferred_element_type=jnp.float32))    # (BT, T, HS) f32

    # TODO(synk): nn.Dropout(0.2) on attention weights / projection outputs is
    # identity in eval mode; training-mode dropout is not applied here.
    attn = jnp.concatenate(head_outs, axis=-1).reshape(rows, d)  # (rows, D) f32

    # ---------------- output projection + residual 1 ----------------
    proj = jnp.dot(attn.astype(jnp.bfloat16), wo_ref[...],
                   preferred_element_type=jnp.float32) + bo_ref[...]
    xw = x + proj                                              # (rows, D) f32

    # ---------------- LayerNorm 2 + FFN + residual 2 ----------------
    xn2 = _layernorm_f32(xw, ln2w_ref[...], ln2b_ref[...])
    h1 = jnp.dot(xn2.astype(jnp.bfloat16), w1_ref[...],
                 preferred_element_type=jnp.float32) + b1_ref[...]    # (rows, 4D)
    h1 = jnp.maximum(h1, 0.0)
    ffn = jnp.dot(h1.astype(jnp.bfloat16), w2_ref[...],
                  preferred_element_type=jnp.float32) + b2_ref[...]   # (rows, D)
    out = xw + ffn

    o_ref[...] = out.reshape(bt, t, d).astype(o_ref.dtype)


def transformer_block_forward(x, params, *, batch_tile=None):
    """x: (B, T, D_MODEL) f32. params: dict of block weights. Returns (B, T, D_MODEL)."""
    B, T, D = x.shape
    if not (T <= CTX_LENGTH and D == D_MODEL):
        raise ValueError(f"Invalid input shape: {x.shape}")

    if batch_tile is None:
        # Aim for >= 256 rows per MXU push (v6e/v7x 256-wide MXU) while evenly dividing B.
        batch_tile = min(B, max(1, 256 // T))
        while B % batch_tile:
            batch_tile -= 1
    assert B % batch_tile == 0, (B, batch_tile)
    grid = (B // batch_tile,)

    # MXU operands in bf16 (halves weight DMA bytes); LN/bias params stay f32.
    wqkv = params['wqkv'].astype(jnp.bfloat16)
    wo = params['wo'].astype(jnp.bfloat16)
    w1 = params['w1'].astype(jnp.bfloat16)
    w2 = params['w2'].astype(jnp.bfloat16)

    def full(shape):
        return pl.BlockSpec(shape, lambda b: (0,) * len(shape))

    return pl.pallas_call(
        _transformer_block_kernel,
        out_shape=jax.ShapeDtypeStruct((B, T, D), x.dtype),
        grid_spec=pltpu.PrefetchScalarGridSpec(
            num_scalar_prefetch=0,
            grid=grid,
            in_specs=[
                pl.BlockSpec((batch_tile, T, D), lambda b: (b, 0, 0)),   # x
                full((1, D)), full((1, D)),                              # ln1 gamma/beta
                full((D, 3 * D)),                                        # fused Wqkv
                full((D, D)), full((1, D)),                              # Wo, bo
                full((1, D)), full((1, D)),                              # ln2 gamma/beta
                full((D, FF_DIM)), full((1, FF_DIM)),                    # W1, b1
                full((FF_DIM, D)), full((1, D)),                         # W2, b2
            ],
            out_specs=pl.BlockSpec((batch_tile, T, D), lambda b: (b, 0, 0)),
        ),
        compiler_params=pltpu.CompilerParams(
            dimension_semantics=("parallel",),
        ),
    )(x, params['ln1_w'], params['ln1_b'], wqkv, wo, params['bo'],
      params['ln2_w'], params['ln2_b'], w1, params['b1'], w2, params['b2'])


def _reference_forward(x, params):
    """Pure-JAX f32 reference matching the PyTorch TransformerBlock (eval mode)."""
    D = D_MODEL

    def ln(y, w, b):
        mu = y.mean(-1, keepdims=True)
        var = ((y - mu) ** 2).mean(-1, keepdims=True)
        return (y - mu) / jnp.sqrt(var + LN_EPS) * w + b

    xn1 = ln(x, params['ln1_w'][0], params['ln1_b'][0])
    qkv = xn1 @ params['wqkv']
    q, k, v = qkv[..., :D], qkv[..., D:2 * D], qkv[..., 2 * D:]
    T = x.shape[1]
    tril = jnp.tril(jnp.ones((T, T), dtype=bool))
    scale = 1.0 / math.sqrt(HEAD_SIZE)
    heads = []
    for h in range(NUM_HEAD):
        sl = slice(h * HEAD_SIZE, (h + 1) * HEAD_SIZE)
        s = jnp.einsum('bqd,bkd->bqk', q[..., sl], k[..., sl]) * scale
        s = jnp.where(tril, s, -jnp.inf)
        p = jax.nn.softmax(s, axis=-1)
        heads.append(p @ v[..., sl])
    attn = jnp.concatenate(heads, axis=-1)
    xw = x + attn @ params['wo'] + params['bo'][0]
    xn2 = ln(xw, params['ln2_w'][0], params['ln2_b'][0])
    h1 = jax.nn.relu(xn2 @ params['w1'] + params['b1'][0])
    return xw + h1 @ params['w2'] + params['b2'][0]


if __name__ == "__main__":
    key = jax.random.PRNGKey(0)
    keys = jax.random.split(key, 12)

    B, T = 4, 16
    x = jax.random.normal(keys[0], (B, T, D_MODEL), dtype=jnp.float32)

    bound = 1.0 / math.sqrt(D_MODEL)
    u = lambda k, shape, b=bound: jax.random.uniform(k, shape, jnp.float32, -b, b)

    params = dict(
        ln1_w=1.0 + 0.1 * jax.random.normal(keys[1], (1, D_MODEL), jnp.float32),
        ln1_b=0.1 * jax.random.normal(keys[2], (1, D_MODEL), jnp.float32),
        # Fused QKV: columns [0:64]=Q, [64:128]=K, [128:192]=V; within each,
        # head h occupies columns h*16:(h+1)*16 (matches the reference slicing).
        wqkv=u(keys[3], (D_MODEL, 3 * D_MODEL)),
        wo=u(keys[4], (D_MODEL, D_MODEL)),
        bo=u(keys[5], (1, D_MODEL)),
        ln2_w=1.0 + 0.1 * jax.random.normal(keys[6], (1, D_MODEL), jnp.float32),
        ln2_b=0.1 * jax.random.normal(keys[7], (1, D_MODEL), jnp.float32),
        w1=u(keys[8], (D_MODEL, FF_DIM)),
        b1=u(keys[9], (1, FF_DIM)),
        w2=u(keys[10], (FF_DIM, D_MODEL), 1.0 / math.sqrt(FF_DIM)),
        b2=u(keys[11], (1, D_MODEL), 1.0 / math.sqrt(FF_DIM)),
    )

    # batch_tile=2 -> grid=(2,) so both v7x TensorCores get a tile.
    out = transformer_block_forward(x, params, batch_tile=2)
    out = jax.block_until_ready(out)

    ref = _reference_forward(x, params)
    assert out.shape == (B, T, D_MODEL)
    # bf16 MXU operands (f32 accumulation) vs. the f32 reference -> bf16-level tolerance.
    assert jnp.allclose(out, ref, atol=5e-2, rtol=5e-2), float(jnp.max(jnp.abs(out - ref)))

    print("KERNEL_OK")
</pallas_src>

<mosaic_0001>
module attributes {stable_mosaic.version = 11 : i64} {
  func.func @_transformer_block_kernel(%arg0: i32, %arg1: memref<2x16x64xf32, #tpu.memory_space<vmem>>, %arg2: memref<1x64xf32, #tpu.memory_space<vmem>>, %arg3: memref<1x64xf32, #tpu.memory_space<vmem>>, %arg4: memref<64x192xbf16, #tpu.memory_space<vmem>>, %arg5: memref<64x64xbf16, #tpu.memory_space<vmem>>, %arg6: memref<1x64xf32, #tpu.memory_space<vmem>>, %arg7: memref<1x64xf32, #tpu.memory_space<vmem>>, %arg8: memref<1x64xf32, #tpu.memory_space<vmem>>, %arg9: memref<64x256xbf16, #tpu.memory_space<vmem>>, %arg10: memref<1x256xf32, #tpu.memory_space<vmem>>, %arg11: memref<256x64xbf16, #tpu.memory_space<vmem>>, %arg12: memref<1x64xf32, #tpu.memory_space<vmem>>, %arg13: memref<2x16x64xf32, #tpu.memory_space<vmem>>) attributes {dimension_semantics = [#tpu.dimension_semantics<parallel>], iteration_bounds = array<i64: 2>, scalar_prefetch = 0 : i64, scratch_operands = 0 : i64, tpu.core_type = #tpu.core_type<tc>, window_params = [{transform_indices = @transform_0, window_bounds = array<i64: 2, 16, 64>}, {pipeline_mode = #tpu.pipeline_mode<synchronous>, transform_indices = @transform_1, window_bounds = array<i64: 1, 64>}, {pipeline_mode = #tpu.pipeline_mode<synchronous>, transform_indices = @transform_2, window_bounds = array<i64: 1, 64>}, {pipeline_mode = #tpu.pipeline_mode<synchronous>, transform_indices = @transform_3, window_bounds = array<i64: 64, 192>}, {pipeline_mode = #tpu.pipeline_mode<synchronous>, transform_indices = @transform_4, window_bounds = array<i64: 64, 64>}, {pipeline_mode = #tpu.pipeline_mode<synchronous>, transform_indices = @transform_5, window_bounds = array<i64: 1, 64>}, {pipeline_mode = #tpu.pipeline_mode<synchronous>, transform_indices = @transform_6, window_bounds = array<i64: 1, 64>}, {pipeline_mode = #tpu.pipeline_mode<synchronous>, transform_indices = @transform_7, window_bounds = array<i64: 1, 64>}, {pipeline_mode = #tpu.pipeline_mode<synchronous>, transform_indices = @transform_8, window_bounds = array<i64: 64, 256>}, {pipeline_mode = #tpu.pipeline_mode<synchronous>, transform_indices = @transform_9, window_bounds = array<i64: 1, 256>}, {pipeline_mode = #tpu.pipeline_mode<synchronous>, transform_indices = @transform_10, window_bounds = array<i64: 256, 64>}, {pipeline_mode = #tpu.pipeline_mode<synchronous>, transform_indices = @transform_11, window_bounds = array<i64: 1, 64>}, {transform_indices = @transform_12, window_bounds = array<i64: 2, 16, 64>}]} {
    %c0 = arith.constant 0 : index
    %c0_0 = arith.constant 0 : index
    %c0_1 = arith.constant 0 : index
    %0 = vector.load %arg1[%c0, %c0_0, %c0_1] : memref<2x16x64xf32, #tpu.memory_space<vmem>>, vector<2x16x64xf32>
    %1 = vector.shape_cast %0 : vector<2x16x64xf32> to vector<32x64xf32>
    %c0_2 = arith.constant 0 : index
    %c0_3 = arith.constant 0 : index
    %2 = vector.load %arg2[%c0_2, %c0_3] : memref<1x64xf32, #tpu.memory_space<vmem>>, vector<1x64xf32>
    %c0_4 = arith.constant 0 : index
    %c0_5 = arith.constant 0 : index
    %3 = vector.load %arg3[%c0_4, %c0_5] : memref<1x64xf32, #tpu.memory_space<vmem>>, vector<1x64xf32>
    %cst = arith.constant dense<0.000000e+00> : vector<32xf32>
    %4 = vector.multi_reduction <add>, %1, %cst [1] : vector<32x64xf32> to vector<32xf32>
    %5 = vector.shape_cast %4 : vector<32xf32> to vector<32x1xf32>
    %cst_6 = arith.constant 6.400000e+01 : f32
    %6 = vector.broadcast %cst_6 : f32 to vector<32x1xf32>
    %7 = arith.divf %5, %6 : vector<32x1xf32>
    %8 = vector.broadcast %7 : vector<32x1xf32> to vector<32x64xf32>
    %9 = arith.subf %1, %8 : vector<32x64xf32>
    %10 = arith.mulf %9, %9 : vector<32x64xf32>
    %cst_7 = arith.constant dense<0.000000e+00> : vector<32xf32>
    %11 = vector.multi_reduction <add>, %10, %cst_7 [1] : vector<32x64xf32> to vector<32xf32>
    %12 = vector.shape_cast %11 : vector<32xf32> to vector<32x1xf32>
    %cst_8 = arith.constant 6.400000e+01 : f32
    %13 = vector.broadcast %cst_8 : f32 to vector<32x1xf32>
    %14 = arith.divf %12, %13 : vector<32x1xf32>
    %cst_9 = arith.constant 9.99999974E-6 : f32
    %15 = vector.broadcast %cst_9 : f32 to vector<32x1xf32>
    %16 = arith.addf %14, %15 : vector<32x1xf32>
    %17 = math.rsqrt %16 : vector<32x1xf32>
    %18 = vector.broadcast %17 : vector<32x1xf32> to vector<32x64xf32>
    %19 = arith.mulf %9, %18 : vector<32x64xf32>
    %20 = vector.broadcast %2 : vector<1x64xf32> to vector<32x64xf32>
    %21 = arith.mulf %19, %20 : vector<32x64xf32>
    %22 = vector.broadcast %3 : vector<1x64xf32> to vector<32x64xf32>
    %23 = arith.addf %21, %22 : vector<32x64xf32>
    %24 = arith.truncf %23 : vector<32x64xf32> to vector<32x64xbf16>
    %c0_10 = arith.constant 0 : index
    %c0_11 = arith.constant 0 : index
    %25 = vector.load %arg4[%c0_10, %c0_11] : memref<64x192xbf16, #tpu.memory_space<vmem>>, vector<64x192xbf16>
    %cst_12 = arith.constant dense<0.000000e+00> : vector<32x192xf32>
    %26 = tpu.matmul %24, %25, %cst_12 {dimension_numbers = #tpu.dot_dimension_numbers<[1], [0], [0], [1], [0, 0, 1, 1], [], []>} : vector<32x64xbf16>, vector<64x192xbf16>, vector<32x192xf32> -> vector<32x192xf32>
    %27 = vector.extract_strided_slice %26 {offsets = [0, 0], sizes = [32, 64], strides = [1, 1]} : vector<32x192xf32> to vector<32x64xf32>
    %cst_13 = arith.constant 2.500000e-01 : f32
    %28 = vector.broadcast %cst_13 : f32 to vector<32x64xf32>
    %29 = arith.mulf %27, %28 : vector<32x64xf32>
    %30 = arith.truncf %29 : vector<32x64xf32> to vector<32x64xbf16>
    %31 = vector.shape_cast %30 : vector<32x64xbf16> to vector<2x16x64xbf16>
    %32 = vector.extract_strided_slice %26 {offsets = [0, 64], sizes = [32, 64], strides = [1, 1]} : vector<32x192xf32> to vector<32x64xf32>
    %33 = arith.truncf %32 : vector<32x64xf32> to vector<32x64xbf16>
    %34 = vector.shape_cast %33 : vector<32x64xbf16> to vector<2x16x64xbf16>
    %35 = vector.extract_strided_slice %26 {offsets = [0, 128], sizes = [32, 64], strides = [1, 1]} : vector<32x192xf32> to vector<32x64xf32>
    %36 = arith.truncf %35 : vector<32x64xf32> to vector<32x64xbf16>
    %37 = vector.shape_cast %36 : vector<32x64xbf16> to vector<2x16x64xbf16>
    %38 = tpu.iota {dimensions = array<i32: 0>} : vector<16x16xi32>
    %39 = tpu.iota {dimensions = array<i32: 1>} : vector<16x16xi32>
    %40 = arith.cmpi sle, %39, %38 : vector<16x16xi32>
    %41 = vector.extract_strided_slice %31 {offsets = [0, 0, 0], sizes = [2, 16, 16], strides = [1, 1, 1]} : vector<2x16x64xbf16> to vector<2x16x16xbf16>
    %42 = vector.extract_strided_slice %34 {offsets = [0, 0, 0], sizes = [2, 16, 16], strides = [1, 1, 1]} : vector<2x16x64xbf16> to vector<2x16x16xbf16>
    %43 = vector.extract_strided_slice %37 {offsets = [0, 0, 0], sizes = [2, 16, 16], strides = [1, 1, 1]} : vector<2x16x64xbf16> to vector<2x16x16xbf16>
    "tpu.trace_start"() <{level = 10 : i32, message = "bqd,bkd->bqk"}> : () -> ()
    %cst_14 = arith.constant dense<0.000000e+00> : vector<2x16x16xf32>
    %44 = tpu.matmul %41, %42, %cst_14 {dimension_numbers = #tpu.dot_dimension_numbers<[2], [2], [1], [1], [0, 0, 0, 1, 1, 1], [0], [0]>} : vector<2x16x16xbf16>, vector<2x16x16xbf16>, vector<2x16x16xf32> -> vector<2x16x16xf32>
    %cst_15 = arith.constant -1.000000e+30 : f32
    "tpu.trace_stop"() : () -> ()
    %45 = vector.shape_cast %40 : vector<16x16xi1> to vector<1x16x16xi1>
    %46 = vector.broadcast %45 : vector<1x16x16xi1> to vector<2x16x16xi1>
    %47 = vector.broadcast %cst_15 : f32 to vector<2x16x16xf32>
    %48 = arith.select %46, %44, %47 : vector<2x16x16xi1>, vector<2x16x16xf32>
    %cst_16 = arith.constant dense<0xFF800000> : vector<2x16xf32>
    %49 = vector.multi_reduction <maximumf>, %48, %cst_16 [2] : vector<2x16x16xf32> to vector<2x16xf32>
    %50 = vector.shape_cast %49 : vector<2x16xf32> to vector<2x16x1xf32>
    %51 = vector.broadcast %50 : vector<2x16x1xf32> to vector<2x16x16xf32>
    %52 = arith.subf %48, %51 : vector<2x16x16xf32>
    %53 = math.exp %52 : vector<2x16x16xf32>
    %cst_17 = arith.constant dense<0.000000e+00> : vector<2x16xf32>
    %54 = vector.multi_reduction <add>, %53, %cst_17 [2] : vector<2x16x16xf32> to vector<2x16xf32>
    %55 = vector.shape_cast %54 : vector<2x16xf32> to vector<2x16x1xf32>
    %56 = tpu.reciprocal %55 {approx = true} : vector<2x16x1xf32> -> vector<2x16x1xf32>
    %57 = vector.broadcast %56 : vector<2x16x1xf32> to vector<2x16x16xf32>
    %58 = arith.mulf %53, %57 : vector<2x16x16xf32>
    %59 = arith.truncf %58 : vector<2x16x16xf32> to vector<2x16x16xbf16>
    "tpu.trace_start"() <{level = 10 : i32, message = "bqk,bkd->bqd"}> : () -> ()
    %cst_18 = arith.constant dense<0.000000e+00> : vector<2x16x16xf32>
    %60 = tpu.matmul %59, %43, %cst_18 {dimension_numbers = #tpu.dot_dimension_numbers<[2], [1], [1], [2], [0, 0, 0, 1, 1, 2], [0], [0]>} : vector<2x16x16xbf16>, vector<2x16x16xbf16>, vector<2x16x16xf32> -> vector<2x16x16xf32>
    "tpu.trace_stop"() : () -> ()
    %61 = vector.extract_strided_slice %31 {offsets = [0, 0, 16], sizes = [2, 16, 16], strides = [1, 1, 1]} : vector<2x16x64xbf16> to vector<2x16x16xbf16>
    %62 = vector.extract_strided_slice %34 {offsets = [0, 0, 16], sizes = [2, 16, 16], strides = [1, 1, 1]} : vector<2x16x64xbf16> to vector<2x16x16xbf16>
    %63 = vector.extract_strided_slice %37 {offsets = [0, 0, 16], sizes = [2, 16, 16], strides = [1, 1, 1]} : vector<2x16x64xbf16> to vector<2x16x16xbf16>
    "tpu.trace_start"() <{level = 10 : i32, message = "bqd,bkd->bqk"}> : () -> ()
    %cst_19 = arith.constant dense<0.000000e+00> : vector<2x16x16xf32>
    %64 = tpu.matmul %61, %62, %cst_19 {dimension_numbers = #tpu.dot_dimension_numbers<[2], [2], [1], [1], [0, 0, 0, 1, 1, 1], [0], [0]>} : vector<2x16x16xbf16>, vector<2x16x16xbf16>, vector<2x16x16xf32> -> vector<2x16x16xf32>
    %cst_20 = arith.constant -1.000000e+30 : f32
    "tpu.trace_stop"() : () -> ()
    %65 = vector.shape_cast %40 : vector<16x16xi1> to vector<1x16x16xi1>
    %66 = vector.broadcast %65 : vector<1x16x16xi1> to vector<2x16x16xi1>
    %67 = vector.broadcast %cst_20 : f32 to vector<2x16x16xf32>
    %68 = arith.select %66, %64, %67 : vector<2x16x16xi1>, vector<2x16x16xf32>
    %cst_21 = arith.constant dense<0xFF800000> : vector<2x16xf32>
    %69 = vector.multi_reduction <maximumf>, %68, %cst_21 [2] : vector<2x16x16xf32> to vector<2x16xf32>
    %70 = vector.shape_cast %69 : vector<2x16xf32> to vector<2x16x1xf32>
    %71 = vector.broadcast %70 : vector<2x16x1xf32> to vector<2x16x16xf32>
    %72 = arith.subf %68, %71 : vector<2x16x16xf32>
    %73 = math.exp %72 : vector<2x16x16xf32>
    %cst_22 = arith.constant dense<0.000000e+00> : vector<2x16xf32>
    %74 = vector.multi_reduction <add>, %73, %cst_22 [2] : vector<2x16x16xf32> to vector<2x16xf32>
    %75 = vector.shape_cast %74 : vector<2x16xf32> to vector<2x16x1xf32>
    %76 = tpu.reciprocal %75 {approx = true} : vector<2x16x1xf32> -> vector<2x16x1xf32>
    %77 = vector.broadcast %76 : vector<2x16x1xf32> to vector<2x16x16xf32>
    %78 = arith.mulf %73, %77 : vector<2x16x16xf32>
    %79 = arith.truncf %78 : vector<2x16x16xf32> to vector<2x16x16xbf16>
    "tpu.trace_start"() <{level = 10 : i32, message = "bqk,bkd->bqd"}> : () -> ()
    %cst_23 = arith.constant dense<0.000000e+00> : vector<2x16x16xf32>
    %80 = tpu.matmul %79, %63, %cst_23 {dimension_numbers = #tpu.dot_dimension_numbers<[2], [1], [1], [2], [0, 0, 0, 1, 1, 2], [0], [0]>} : vector<2x16x16xbf16>, vector<2x16x16xbf16>, vector<2x16x16xf32> -> vector<2x16x16xf32>
    "tpu.trace_stop"() : () -> ()
    %81 = vector.extract_strided_slice %31 {offsets = [0, 0, 32], sizes = [2, 16, 16], strides = [1, 1, 1]} : vector<2x16x64xbf16> to vector<2x16x16xbf16>
    %82 = vector.extract_strided_slice %34 {offsets = [0, 0, 32], sizes = [2, 16, 16], strides = [1, 1, 1]} : vector<2x16x64xbf16> to vector<2x16x16xbf16>
    %83 = vector.extract_strided_slice %37 {offsets = [0, 0, 32], sizes = [2, 16, 16], strides = [1, 1, 1]} : vector<2x16x64xbf16> to vector<2x16x16xbf16>
    "tpu.trace_start"() <{level = 10 : i32, message = "bqd,bkd->bqk"}> : () -> ()
    %cst_24 = arith.constant dense<0.000000e+00> : vector<2x16x16xf32>
    %84 = tpu.matmul %81, %82, %cst_24 {dimension_numbers = #tpu.dot_dimension_numbers<[2], [2], [1], [1], [0, 0, 0, 1, 1, 1], [0], [0]>} : vector<2x16x16xbf16>, vector<2x16x16xbf16>, vector<2x16x16xf32> -> vector<2x16x16xf32>
    %cst_25 = arith.constant -1.000000e+30 : f32
    "tpu.trace_stop"() : () -> ()
    %85 = vector.shape_cast %40 : vector<16x16xi1> to vector<1x16x16xi1>
    %86 = vector.broadcast %85 : vector<1x16x16xi1> to vector<2x16x16xi1>
    %87 = vector.broadcast %cst_25 : f32 to vector<2x16x16xf32>
    %88 = arith.select %86, %84, %87 : vector<2x16x16xi1>, vector<2x16x16xf32>
    %cst_26 = arith.constant dense<0xFF800000> : vector<2x16xf32>
    %89 = vector.multi_reduction <maximumf>, %88, %cst_26 [2] : vector<2x16x16xf32> to vector<2x16xf32>
    %90 = vector.shape_cast %89 : vector<2x16xf32> to vector<2x16x1xf32>
    %91 = vector.broadcast %90 : vector<2x16x1xf32> to vector<2x16x16xf32>
    %92 = arith.subf %88, %91 : vector<2x16x16xf32>
    %93 = math.exp %92 : vector<2x16x16xf32>
    %cst_27 = arith.constant dense<0.000000e+00> : vector<2x16xf32>
    %94 = vector.multi_reduction <add>, %93, %cst_27 [2] : vector<2x16x16xf32> to vector<2x16xf32>
    %95 = vector.shape_cast %94 : vector<2x16xf32> to vector<2x16x1xf32>
    %96 = tpu.reciprocal %95 {approx = true} : vector<2x16x1xf32> -> vector<2x16x1xf32>
    %97 = vector.broadcast %96 : vector<2x16x1xf32> to vector<2x16x16xf32>
    %98 = arith.mulf %93, %97 : vector<2x16x16xf32>
    %99 = arith.truncf %98 : vector<2x16x16xf32> to vector<2x16x16xbf16>
    "tpu.trace_start"() <{level = 10 : i32, message = "bqk,bkd->bqd"}> : () -> ()
    %cst_28 = arith.constant dense<0.000000e+00> : vector<2x16x16xf32>
    %100 = tpu.matmul %99, %83, %cst_28 {dimension_numbers = #tpu.dot_dimension_numbers<[2], [1], [1], [2], [0, 0, 0, 1, 1, 2], [0], [0]>} : vector<2x16x16xbf16>, vector<2x16x16xbf16>, vector<2x16x16xf32> -> vector<2x16x16xf32>
    "tpu.trace_stop"() : () -> ()
    %101 = vector.extract_strided_slice %31 {offsets = [0, 0, 48], sizes = [2, 16, 16], strides = [1, 1, 1]} : vector<2x16x64xbf16> to vector<2x16x16xbf16>
    %102 = vector.extract_strided_slice %34 {offsets = [0, 0, 48], sizes = [2, 16, 16], strides = [1, 1, 1]} : vector<2x16x64xbf16> to vector<2x16x16xbf16>
    %103 = vector.extract_strided_slice %37 {offsets = [0, 0, 48], sizes = [2, 16, 16], strides = [1, 1, 1]} : vector<2x16x64xbf16> to vector<2x16x16xbf16>
    "tpu.trace_start"() <{level = 10 : i32, message = "bqd,bkd->bqk"}> : () -> ()
    %cst_29 = arith.constant dense<0.000000e+00> : vector<2x16x16xf32>
    %104 = tpu.matmul %101, %102, %cst_29 {dimension_numbers = #tpu.dot_dimension_numbers<[2], [2], [1], [1], [0, 0, 0, 1, 1, 1], [0], [0]>} : vector<2x16x16xbf16>, vector<2x16x16xbf16>, vector<2x16x16xf32> -> vector<2x16x16xf32>
    %cst_30 = arith.constant -1.000000e+30 : f32
    "tpu.trace_stop"() : () -> ()
    %105 = vector.shape_cast %40 : vector<16x16xi1> to vector<1x16x16xi1>
    %106 = vector.broadcast %105 : vector<1x16x16xi1> to vector<2x16x16xi1>
    %107 = vector.broadcast %cst_30 : f32 to vector<2x16x16xf32>
    %108 = arith.select %106, %104, %107 : vector<2x16x16xi1>, vector<2x16x16xf32>
    %cst_31 = arith.constant dense<0xFF800000> : vector<2x16xf32>
    %109 = vector.multi_reduction <maximumf>, %108, %cst_31 [2] : vector<2x16x16xf32> to vector<2x16xf32>
    %110 = vector.shape_cast %109 : vector<2x16xf32> to vector<2x16x1xf32>
    %111 = vector.broadcast %110 : vector<2x16x1xf32> to vector<2x16x16xf32>
    %112 = arith.subf %108, %111 : vector<2x16x16xf32>
    %113 = math.exp %112 : vector<2x16x16xf32>
    %cst_32 = arith.constant dense<0.000000e+00> : vector<2x16xf32>
    %114 = vector.multi_reduction <add>, %113, %cst_32 [2] : vector<2x16x16xf32> to vector<2x16xf32>
    %115 = vector.shape_cast %114 : vector<2x16xf32> to vector<2x16x1xf32>
    %116 = tpu.reciprocal %115 {approx = true} : vector<2x16x1xf32> -> vector<2x16x1xf32>
    %117 = vector.broadcast %116 : vector<2x16x1xf32> to vector<2x16x16xf32>
    %118 = arith.mulf %113, %117 : vector<2x16x16xf32>
    %119 = arith.truncf %118 : vector<2x16x16xf32> to vector<2x16x16xbf16>
    "tpu.trace_start"() <{level = 10 : i32, message = "bqk,bkd->bqd"}> : () -> ()
    %cst_33 = arith.constant dense<0.000000e+00> : vector<2x16x16xf32>
    %120 = tpu.matmul %119, %103, %cst_33 {dimension_numbers = #tpu.dot_dimension_numbers<[2], [1], [1], [2], [0, 0, 0, 1, 1, 2], [0], [0]>} : vector<2x16x16xbf16>, vector<2x16x16xbf16>, vector<2x16x16xf32> -> vector<2x16x16xf32>
    "tpu.trace_stop"() : () -> ()
    %121 = tpu.concatenate %60, %80, %100, %120 in 2 : vector<2x16x16xf32>, vector<2x16x16xf32>, vector<2x16x16xf32>, vector<2x16x16xf32> -> vector<2x16x64xf32>
    %122 = vector.shape_cast %121 : vector<2x16x64xf32> to vector<32x64xf32>
    %123 = arith.truncf %122 : vector<32x64xf32> to vector<32x64xbf16>
    %c0_34 = arith.constant 0 : index
    %c0_35 = arith.constant 0 : index
    %124 = vector.load %arg5[%c0_34, %c0_35] : memref<64x64xbf16, #tpu.memory_space<vmem>>, vector<64x64xbf16>
    %cst_36 = arith.constant dense<0.000000e+00> : vector<32x64xf32>
    %125 = tpu.matmul %123, %124, %cst_36 {dimension_numbers = #tpu.dot_dimension_numbers<[1], [0], [0], [1], [0, 0, 1, 1], [], []>} : vector<32x64xbf16>, vector<64x64xbf16>, vector<32x64xf32> -> vector<32x64xf32>
    %c0_37 = arith.constant 0 : index
    %c0_38 = arith.constant 0 : index
    %126 = vector.load %arg6[%c0_37, %c0_38] : memref<1x64xf32, #tpu.memory_space<vmem>>, vector<1x64xf32>
    %127 = vector.broadcast %126 : vector<1x64xf32> to vector<32x64xf32>
    %128 = arith.addf %125, %127 : vector<32x64xf32>
    %129 = arith.addf %1, %128 : vector<32x64xf32>
    %c0_39 = arith.constant 0 : index
    %c0_40 = arith.constant 0 : index
    %130 = vector.load %arg7[%c0_39, %c0_40] : memref<1x64xf32, #tpu.memory_space<vmem>>, vector<1x64xf32>
    %c0_41 = arith.constant 0 : index
    %c0_42 = arith.constant 0 : index
    %131 = vector.load %arg8[%c0_41, %c0_42] : memref<1x64xf32, #tpu.memory_space<vmem>>, vector<1x64xf32>
    %cst_43 = arith.constant dense<0.000000e+00> : vector<32xf32>
    %132 = vector.multi_reduction <add>, %129, %cst_43 [1] : vector<32x64xf32> to vector<32xf32>
    %133 = vector.shape_cast %132 : vector<32xf32> to vector<32x1xf32>
    %cst_44 = arith.constant 6.400000e+01 : f32
    %134 = vector.broadcast %cst_44 : f32 to vector<32x1xf32>
    %135 = arith.divf %133, %134 : vector<32x1xf32>
    %136 = vector.broadcast %135 : vector<32x1xf32> to vector<32x64xf32>
    %137 = arith.subf %129, %136 : vector<32x64xf32>
    %138 = arith.mulf %137, %137 : vector<32x64xf32>
    %cst_45 = arith.constant dense<0.000000e+00> : vector<32xf32>
    %139 = vector.multi_reduction <add>, %138, %cst_45 [1] : vector<32x64xf32> to vector<32xf32>
    %140 = vector.shape_cast %139 : vector<32xf32> to vector<32x1xf32>
    %cst_46 = arith.constant 6.400000e+01 : f32
    %141 = vector.broadcast %cst_46 : f32 to vector<32x1xf32>
    %142 = arith.divf %140, %141 : vector<32x1xf32>
    %cst_47 = arith.constant 9.99999974E-6 : f32
    %143 = vector.broadcast %cst_47 : f32 to vector<32x1xf32>
    %144 = arith.addf %142, %143 : vector<32x1xf32>
    %145 = math.rsqrt %144 : vector<32x1xf32>
    %146 = vector.broadcast %145 : vector<32x1xf32> to vector<32x64xf32>
    %147 = arith.mulf %137, %146 : vector<32x64xf32>
    %148 = vector.broadcast %130 : vector<1x64xf32> to vector<32x64xf32>
    %149 = arith.mulf %147, %148 : vector<32x64xf32>
    %150 = vector.broadcast %131 : vector<1x64xf32> to vector<32x64xf32>
    %151 = arith.addf %149, %150 : vector<32x64xf32>
    %152 = arith.truncf %151 : vector<32x64xf32> to vector<32x64xbf16>
    %c0_48 = arith.constant 0 : index
    %c0_49 = arith.constant 0 : index
    %153 = vector.load %arg9[%c0_48, %c0_49] : memref<64x256xbf16, #tpu.memory_space<vmem>>, vector<64x256xbf16>
    %cst_50 = arith.constant dense<0.000000e+00> : vector<32x256xf32>
    %154 = tpu.matmul %152, %153, %cst_50 {dimension_numbers = #tpu.dot_dimension_numbers<[1], [0], [0], [1], [0, 0, 1, 1], [], []>} : vector<32x64xbf16>, vector<64x256xbf16>, vector<32x256xf32> -> vector<32x256xf32>
    %c0_51 = arith.constant 0 : index
    %c0_52 = arith.constant 0 : index
    %155 = vector.load %arg10[%c0_51, %c0_52] : memref<1x256xf32, #tpu.memory_space<vmem>>, vector<1x256xf32>
    %156 = vector.broadcast %155 : vector<1x256xf32> to vector<32x256xf32>
    %157 = arith.addf %154, %156 : vector<32x256xf32>
    %cst_53 = arith.constant 0.000000e+00 : f32
    %158 = vector.broadcast %cst_53 : f32 to vector<32x256xf32>
    %159 = arith.maximumf %157, %158 : vector<32x256xf32>
    %160 = arith.truncf %159 : vector<32x256xf32> to vector<32x256xbf16>
    %c0_54 = arith.constant 0 : index
    %c0_55 = arith.constant 0 : index
    %161 = vector.load %arg11[%c0_54, %c0_55] : memref<256x64xbf16, #tpu.memory_space<vmem>>, vector<256x64xbf16>
    %cst_56 = arith.constant dense<0.000000e+00> : vector<32x64xf32>
    %162 = tpu.matmul %160, %161, %cst_56 {dimension_numbers = #tpu.dot_dimension_numbers<[1], [0], [0], [1], [0, 0, 1, 1], [], []>} : vector<32x256xbf16>, vector<256x64xbf16>, vector<32x64xf32> -> vector<32x64xf32>
    %c0_57 = arith.constant 0 : index
    %c0_58 = arith.constant 0 : index
    %163 = vector.load %arg12[%c0_57, %c0_58] : memref<1x64xf32, #tpu.memory_space<vmem>>, vector<1x64xf32>
    %164 = vector.broadcast %163 : vector<1x64xf32> to vector<32x64xf32>
    %165 = arith.addf %162, %164 : vector<32x64xf32>
    %166 = arith.addf %129, %165 : vector<32x64xf32>
    %167 = vector.shape_cast %166 : vector<32x64xf32> to vector<2x16x64xf32>
    %c0_59 = arith.constant 0 : index
    %c0_60 = arith.constant 0 : index
    %c0_61 = arith.constant 0 : index
    %168 = vector.load %arg13[%c0_59, %c0_60, %c0_61] : memref<2x16x64xf32, #tpu.memory_space<vmem>>, vector<2x16x64xf32>
    tpu.vector_store %arg13[%c0_59, %c0_60, %c0_61], %167 {strides = array<i32>} : memref<2x16x64xf32, #tpu.memory_space<vmem>>, vector<2x16x64xf32>,
    return
  }
  func.func @transform_0(%arg0: i32) -> (i32, i32, i32) {
    %c0_i32 = arith.constant 0 : i32
    %c0_i32_0 = arith.constant 0 : i32
    %c0_i32_1 = arith.constant 0 : i32
    return %arg0, %c0_i32, %c0_i32_0 : i32, i32, i32
  }
  func.func @transform_1(%arg0: i32) -> (i32, i32) {
    %c0_i32 = arith.constant 0 : i32
    %c0_i32_0 = arith.constant 0 : i32
    %c0_i32_1 = arith.constant 0 : i32
    return %c0_i32, %c0_i32_0 : i32, i32
  }
  func.func @transform_2(%arg0: i32) -> (i32, i32) {
    %c0_i32 = arith.constant 0 : i32
    %c0_i32_0 = arith.constant 0 : i32
    %c0_i32_1 = arith.constant 0 : i32
    return %c0_i32, %c0_i32_0 : i32, i32
  }
  func.func @transform_3(%arg0: i32) -> (i32, i32) {
    %c0_i32 = arith.constant 0 : i32
    %c0_i32_0 = arith.constant 0 : i32
    %c0_i32_1 = arith.constant 0 : i32
    return %c0_i32, %c0_i32_0 : i32, i32
  }
  func.func @transform_4(%arg0: i32) -> (i32, i32) {
    %c0_i32 = arith.constant 0 : i32
    %c0_i32_0 = arith.constant 0 : i32
    %c0_i32_1 = arith.constant 0 : i32
    return %c0_i32, %c0_i32_0 : i32, i32
  }
  func.func @transform_5(%arg0: i32) -> (i32, i32) {
    %c0_i32 = arith.constant 0 : i32
    %c0_i32_0 = arith.constant 0 : i32
    %c0_i32_1 = arith.constant 0 : i32
    return %c0_i32, %c0_i32_0 : i32, i32
  }
  func.func @transform_6(%arg0: i32) -> (i32, i32) {
    %c0_i32 = arith.constant 0 : i32
    %c0_i32_0 = arith.constant 0 : i32
    %c0_i32_1 = arith.constant 0 : i32
    return %c0_i32, %c0_i32_0 : i32, i32
  }
  func.func @transform_7(%arg0: i32) -> (i32, i32) {
    %c0_i32 = arith.constant 0 : i32
    %c0_i32_0 = arith.constant 0 : i32
    %c0_i32_1 = arith.constant 0 : i32
    return %c0_i32, %c0_i32_0 : i32, i32
  }
  func.func @transform_8(%arg0: i32) -> (i32, i32) {
    %c0_i32 = arith.constant 0 : i32
    %c0_i32_0 = arith.constant 0 : i32
    %c0_i32_1 = arith.constant 0 : i32
    return %c0_i32, %c0_i32_0 : i32, i32
  }
  func.func @transform_9(%arg0: i32) -> (i32, i32) {
    %c0_i32 = arith.constant 0 : i32
    %c0_i32_0 = arith.constant 0 : i32
    %c0_i32_1 = arith.constant 0 : i32
    return %c0_i32, %c0_i32_0 : i32, i32
  }
  func.func @transform_10(%arg0: i32) -> (i32, i32) {
    %c0_i32 = arith.constant 0 : i32
    %c0_i32_0 = arith.constant 0 : i32
    %c0_i32_1 = arith.constant 0 : i32
    return %c0_i32, %c0_i32_0 : i32, i32
  }
  func.func @transform_11(%arg0: i32) -> (i32, i32) {
    %c0_i32 = arith.constant 0 : i32
    %c0_i32_0 = arith.constant 0 : i32
    %c0_i32_1 = arith.constant 0 : i32
    return %c0_i32, %c0_i32_0 : i32, i32
  }
  func.func @transform_12(%arg0: i32) -> (i32, i32, i32) {
    %c0_i32 = arith.constant 0 : i32
    %c0_i32_0 = arith.constant 0 : i32
    %c0_i32_1 = arith.constant 0 : i32
    return %arg0, %c0_i32, %c0_i32_0 : i32, i32, i32
  }
}

</mosaic_0001>

<llo_original>
// kernel: tpu_custom_call.1
$region0: #{tpu_custom_call.1}
  #allocation0 [shape = 'u32[]', space=smem, size = 0x4, offset = 0x4, fixed_abs, tag = 'smem constant byte address 0x4 - core index']
  #allocation1 [shape = 'u32[72,128]{1,0:T(1,128)}', space=vmem, size = 0x9000, scoped, tag = 'internal scratch']
  %s0 = inlined_call_operand.vmem [shape: f32[4,16,64], index: 0, kind: input, shape index: {}]
  %s1 = inlined_call_operand.hbm [shape: f32[1,64], index: 1, kind: input, shape index: {}]
  %s2 = inlined_call_operand.hbm [shape: f32[1,64], index: 2, kind: input, shape index: {}]
  %s3 = inlined_call_operand.vmem [shape: bf16[64,192], index: 3, kind: input, shape index: {}]
  %s4 = inlined_call_operand.hbm [shape: bf16[64,64], index: 4, kind: input, shape index: {}]
  %s5 = inlined_call_operand.hbm [shape: f32[1,64], index: 5, kind: input, shape index: {}]
  %s6 = inlined_call_operand.vmem [shape: f32[1,64], index: 6, kind: input, shape index: {}]
  %s7 = inlined_call_operand.vmem [shape: f32[1,64], index: 7, kind: input, shape index: {}]
  %s8 = inlined_call_operand.vmem [shape: bf16[64,256], index: 8, kind: input, shape index: {}]
  %s9 = inlined_call_operand.vmem [shape: f32[1,256], index: 9, kind: input, shape index: {}]
  %s10 = inlined_call_operand.vmem [shape: bf16[256,64], index: 10, kind: input, shape index: {}]
  %s11 = inlined_call_operand.vmem [shape: f32[1,64], index: 11, kind: input, shape index: {}]
  %s12 = inlined_call_operand.hbm [shape: f32[4,16,64], index: 12, kind: output, shape index: {}]
  %s13 = sld [smem:[#allocation0]]
  $region97: #{tpu_custom_call.1} parent=0
    _
  %s15 = ssub.s32 1, %s13
  %s16 = scalar_select 0, %s15, %s13
  $region1: #{tpu_custom_call.1} parent=0
    #allocation2 [shape = 'u8[512]{0}', space=vmem, size = 0x400, scoped, tag = 'input window, operand 1, single buffered']
    #allocation3 [shape = 's32[2]{0}', space=sflag, size = 0x8, scoped, tag = 'scoped memory for tpu_custom_call.1']
    #allocation4 [shape = 's32[2]{0}', space=sflag, size = 0x8, scoped, tag = 'scoped memory for tpu_custom_call.1']
    #allocation5 [shape = 'u8[512]{0}', space=vmem, size = 0x400, scoped, tag = 'input window, operand 2, single buffered']
    #allocation6 [shape = 's32[1]{0}', space=sflag, size = 0x4, scoped, tag = 'scoped memory for tpu_custom_call.1']
    #allocation7 [shape = 'u8[16384]{0}', space=vmem, size = 0x4000, scoped, tag = 'input window, operand 4, single buffered']
    #allocation8 [shape = 'u8[512]{0}', space=vmem, size = 0x400, scoped, tag = 'input window, operand 5, single buffered']
    #allocation9 [shape = 's32[1]{0}', space=sflag, size = 0x4, scoped, tag = 'scoped memory for tpu_custom_call.1']
    #allocation10 [shape = 'u8[32768]{0}', space=vmem, size = 0x8000, scoped, tag = 'output window, operand 0']
    %17 = vsyncpa [#allocation3], 0
    %18 = vsyncpa [#allocation6], 0
    %19 = vsyncpa [#allocation9], 0
    %20 = vsyncpa [#allocation4], 0
    %s21 = scalar_lea.sflag [#allocation4], 1
    %22 = vsyncpa %s21, 0
    loop: start=0, step=1, limit=4
    $region2: #{tpu_custom_call.1} parent=1 // loop_pre_header
      _
    $region3: #{tpu_custom_call.1} parent=1 // loop_header
      %s24 = sphi 0, %s28
      %p25 = scmp.ge.s32.totalorder %s24, 4
      %s34 = sphi 0, %s36
      %s37 = sphi 0, %s34
      %s38 = sphi 0, %s37
      %s54 = sphi 0, %s38
      %s58 = sphi 0, %s58
      %s60 = sphi 0, %s58
      %s61 = sphi 0, %s60
      %s75 = sphi 0, %s61
      %s79 = sphi 0, %s79
      %s81 = sphi 0, %s79
      %s82 = sphi 0, %s81
      %s96 = sphi 0, %s82
      %s100 = sphi 0, %s100
      %s102 = sphi 0, %s100
      %s103 = sphi 0, %s102
      %s117 = sphi 0, %s103
      %s121 = sphi 0, %s121
      %s123 = sphi 0, %s121
      %s124 = sphi 0, %s123
      %s138 = sphi 0, %s124
      %s142 = sphi 0, %s142
      %s144 = sphi 0, %s142
      %s145 = sphi 0, %s144
      %s159 = sphi 0, %s145
      %s163 = sphi 0, %s163
      %s165 = sphi 0, %s163
      %s166 = sphi 0, %s165
      %s180 = sphi 0, %s166
      %s184 = sphi 0, %s184
      %s186 = sphi 0, %s184
      %s187 = sphi 0, %s186
      %s201 = sphi 0, %s187
      %s205 = sphi 0, %s205
      %s207 = sphi 0, %s205
      %s208 = sphi 0, %s207
      %s222 = sphi 0, %s208
      %s226 = sphi 0, %s226
      %s228 = sphi 0, %s226
      %s229 = sphi 0, %s228
      %s243 = sphi 0, %s229
      %s247 = sphi 0, %s247
      %s249 = sphi 0, %s247
      %s250 = sphi 0, %s249
      %s264 = sphi 0, %s250
      %s268 = sphi 0, %s268
      %s270 = sphi 0, %s268
      %s271 = sphi 0, %s270
      %s285 = sphi 0, %s271
      %s291 = sphi 0, %s293
      %s294 = sphi 0, %s291
      %s295 = sphi 0, %s294
      %s311 = sphi 0, %s295
    $region4: #{tpu_custom_call.1} parent=1 // loop_header_branch
      %27 = sbr.rel (%p25) target = $region8
    $region5: #{tpu_custom_call.1} parent=1 // loop_body
      %s29 = ssub.s32 %s24, 1
      %s30 = ssub.s32 %s24, 2
      %s31 = sadd.s32 %s24, 1
      %s32 = ssub.s32 %s24, %s31
      %p33 = scmp.eq.s32.totalorder %s32, 0
      %s35 = sadd.s32 %s34, 1
      %s36 = scalar_select %p33, %s34, %s35
      %p39 = pneg %p33
      %p40 = scmp.eq.s32.totalorder %s24, 1
      %p41 = por %p39, %p40
      %p42 = scmp.ne.s32.totalorder %s34, %s37
      %p43 = scmp.eq.s32.totalorder %s24, 0
      %p44 = por %p42, %p43
      %p45 = scmp.ne.s32.totalorder %s34, %s37
      %p46 = scmp.eq.s32.totalorder %s29, 1
      %p47 = por %p45, %p46
      %p48 = scmp.ne.s32.totalorder %s37, %s38
      %p49 = scmp.eq.s32.totalorder %s29, 0
      %p50 = por %p48, %p49
      %p51 = scmp.ne.s32.totalorder %s37, %s38
      %p52 = scmp.eq.s32.totalorder %s30, 1
      %p53 = por %p51, %p52
      %p55 = scmp.ne.s32.totalorder %s38, %s54
      %p56 = scmp.eq.s32.totalorder %s30, 0
      %p57 = por %p55, %p56
      %s59 = sadd.s32 %s58, 1
      %p62 = scmp.eq.s32.totalorder %s24, 1
      %p63 = scmp.ne.s32.totalorder %s58, %s60
      %p64 = scmp.eq.s32.totalorder %s24, 0
      %p65 = por %p63, %p64
      %p66 = scmp.ne.s32.totalorder %s58, %s60
      %p67 = scmp.eq.s32.totalorder %s29, 1
      %p68 = por %p66, %p67
      %p69 = scmp.ne.s32.totalorder %s60, %s61
      %p70 = scmp.eq.s32.totalorder %s29, 0
      %p71 = por %p69, %p70
      %p72 = scmp.ne.s32.totalorder %s60, %s61
      %p73 = scmp.eq.s32.totalorder %s30, 1
      %p74 = por %p72, %p73
      %p76 = scmp.ne.s32.totalorder %s61, %s75
      %p77 = scmp.eq.s32.totalorder %s30, 0
      %p78 = por %p76, %p77
      %s80 = sadd.s32 %s79, 1
      %p83 = scmp.eq.s32.totalorder %s24, 1
      %p84 = scmp.ne.s32.totalorder %s79, %s81
      %p85 = scmp.eq.s32.totalorder %s24, 0
      %p86 = por %p84, %p85
      %p87 = scmp.ne.s32.totalorder %s79, %s81
      %p88 = scmp.eq.s32.totalorder %s29, 1
      %p89 = por %p87, %p88
      %p90 = scmp.ne.s32.totalorder %s81, %s82
      %p91 = scmp.eq.s32.totalorder %s29, 0
      %p92 = por %p90, %p91
      %p93 = scmp.ne.s32.totalorder %s81, %s82
      %p94 = scmp.eq.s32.totalorder %s30, 1
      %p95 = por %p93, %p94
      %p97 = scmp.ne.s32.totalorder %s82, %s96
      %p98 = scmp.eq.s32.totalorder %s30, 0
      %p99 = por %p97, %p98
      %s101 = sadd.s32 %s100, 1
      %p104 = scmp.eq.s32.totalorder %s24, 1
      %p105 = scmp.ne.s32.totalorder %s100, %s102
      %p106 = scmp.eq.s32.totalorder %s24, 0
      %p107 = por %p105, %p106
      %p108 = scmp.ne.s32.totalorder %s100, %s102
      %p109 = scmp.eq.s32.totalorder %s29, 1
      %p110 = por %p108, %p109
      %p111 = scmp.ne.s32.totalorder %s102, %s103
      %p112 = scmp.eq.s32.totalorder %s29, 0
      %p113 = por %p111, %p112
      %p114 = scmp.ne.s32.totalorder %s102, %s103
      %p115 = scmp.eq.s32.totalorder %s30, 1
      %p116 = por %p114, %p115
      %p118 = scmp.ne.s32.totalorder %s103, %s117
      %p119 = scmp.eq.s32.totalorder %s30, 0
      %p120 = por %p118, %p119
      %s122 = sadd.s32 %s121, 1
      %p125 = scmp.eq.s32.totalorder %s24, 1
      %p126 = scmp.ne.s32.totalorder %s121, %s123
      %p127 = scmp.eq.s32.totalorder %s24, 0
      %p128 = por %p126, %p127
      %p129 = scmp.ne.s32.totalorder %s121, %s123
      %p130 = scmp.eq.s32.totalorder %s29, 1
      %p131 = por %p129, %p130
      %p132 = scmp.ne.s32.totalorder %s123, %s124
      %p133 = scmp.eq.s32.totalorder %s29, 0
      %p134 = por %p132, %p133
      %p135 = scmp.ne.s32.totalorder %s123, %s124
      %p136 = scmp.eq.s32.totalorder %s30, 1
      %p137 = por %p135, %p136
      %p139 = scmp.ne.s32.totalorder %s124, %s138
      %p140 = scmp.eq.s32.totalorder %s30, 0
      %p141 = por %p139, %p140
      %s143 = sadd.s32 %s142, 1
      %p146 = scmp.eq.s32.totalorder %s24, 1
      %p147 = scmp.ne.s32.totalorder %s142, %s144
      %p148 = scmp.eq.s32.totalorder %s24, 0
      %p149 = por %p147, %p148
      %p150 = scmp.ne.s32.totalorder %s142, %s144
      %p151 = scmp.eq.s32.totalorder %s29, 1
      %p152 = por %p150, %p151
      %p153 = scmp.ne.s32.totalorder %s144, %s145
      %p154 = scmp.eq.s32.totalorder %s29, 0
      %p155 = por %p153, %p154
      %p156 = scmp.ne.s32.totalorder %s144, %s145
      %p157 = scmp.eq.s32.totalorder %s30, 1
      %p158 = por %p156, %p157
      %p160 = scmp.ne.s32.totalorder %s145, %s159
      %p161 = scmp.eq.s32.totalorder %s30, 0
      %p162 = por %p160, %p161
      %s164 = sadd.s32 %s163, 1
      %p167 = scmp.eq.s32.totalorder %s24, 1
      %p168 = scmp.ne.s32.totalorder %s163, %s165
      %p169 = scmp.eq.s32.totalorder %s24, 0
      %p170 = por %p168, %p169
      %p171 = scmp.ne.s32.totalorder %s163, %s165
      %p172 = scmp.eq.s32.totalorder %s29, 1
      %p173 = por %p171, %p172
      %p174 = scmp.ne.s32.totalorder %s165, %s166
      %p175 = scmp.eq.s32.totalorder %s29, 0
      %p176 = por %p174, %p175
      %p177 = scmp.ne.s32.totalorder %s165, %s166
      %p178 = scmp.eq.s32.totalorder %s30, 1
      %p179 = por %p177, %p178
      %p181 = scmp.ne.s32.totalorder %s166, %s180
      %p182 = scmp.eq.s32.totalorder %s30, 0
      %p183 = por %p181, %p182
      %s185 = sadd.s32 %s184, 1
      %p188 = scmp.eq.s32.totalorder %s24, 1
      %p189 = scmp.ne.s32.totalorder %s184, %s186
      %p190 = scmp.eq.s32.totalorder %s24, 0
      %p191 = por %p189, %p190
      %p192 = scmp.ne.s32.totalorder %s184, %s186
      %p193 = scmp.eq.s32.totalorder %s29, 1
      %p194 = por %p192, %p193
      %p195 = scmp.ne.s32.totalorder %s186, %s187
      %p196 = scmp.eq.s32.totalorder %s29, 0
      %p197 = por %p195, %p196
      %p198 = scmp.ne.s32.totalorder %s186, %s187
      %p199 = scmp.eq.s32.totalorder %s30, 1
      %p200 = por %p198, %p199
      %p202 = scmp.ne.s32.totalorder %s187, %s201
      %p203 = scmp.eq.s32.totalorder %s30, 0
      %p204 = por %p202, %p203
      %s206 = sadd.s32 %s205, 1
      %p209 = scmp.eq.s32.totalorder %s24, 1
      %p210 = scmp.ne.s32.totalorder %s205, %s207
      %p211 = scmp.eq.s32.totalorder %s24, 0
      %p212 = por %p210, %p211
      %p213 = scmp.ne.s32.totalorder %s205, %s207
      %p214 = scmp.eq.s32.totalorder %s29, 1
      %p215 = por %p213, %p214
      %p216 = scmp.ne.s32.totalorder %s207, %s208
      %p217 = scmp.eq.s32.totalorder %s29, 0
      %p218 = por %p216, %p217
      %p219 = scmp.ne.s32.totalorder %s207, %s208
      %p220 = scmp.eq.s32.totalorder %s30, 1
      %p221 = por %p219, %p220
      %p223 = scmp.ne.s32.totalorder %s208, %s222
      %p224 = scmp.eq.s32.totalorder %s30, 0
      %p225 = por %p223, %p224
      %s227 = sadd.s32 %s226, 1
      %p230 = scmp.eq.s32.totalorder %s24, 1
      %p231 = scmp.ne.s32.totalorder %s226, %s228
      %p232 = scmp.eq.s32.totalorder %s24, 0
      %p233 = por %p231, %p232
      %p234 = scmp.ne.s32.totalorder %s226, %s228
      %p235 = scmp.eq.s32.totalorder %s29, 1
      %p236 = por %p234, %p235
      %p237 = scmp.ne.s32.totalorder %s228, %s229
      %p238 = scmp.eq.s32.totalorder %s29, 0
      %p239 = por %p237, %p238
      %p240 = scmp.ne.s32.totalorder %s228, %s229
      %p241 = scmp.eq.s32.totalorder %s30, 1
      %p242 = por %p240, %p241
      %p244 = scmp.ne.s32.totalorder %s229, %s243
      %p245 = scmp.eq.s32.totalorder %s30, 0
      %p246 = por %p244, %p245
      %s248 = sadd.s32 %s247, 1
      %p251 = scmp.eq.s32.totalorder %s24, 1
      %p252 = scmp.ne.s32.totalorder %s247, %s249
      %p253 = scmp.eq.s32.totalorder %s24, 0
      %p254 = por %p252, %p253
      %p255 = scmp.ne.s32.totalorder %s247, %s249
      %p256 = scmp.eq.s32.totalorder %s29, 1
      %p257 = por %p255, %p256
      %p258 = scmp.ne.s32.totalorder %s249, %s250
      %p259 = scmp.eq.s32.totalorder %s29, 0
      %p260 = por %p258, %p259
      %p261 = scmp.ne.s32.totalorder %s249, %s250
      %p262 = scmp.eq.s32.totalorder %s30, 1
      %p263 = por %p261, %p262
      %p265 = scmp.ne.s32.totalorder %s250, %s264
      %p266 = scmp.eq.s32.totalorder %s30, 0
      %p267 = por %p265, %p266
      %s269 = sadd.s32 %s268, 1
      %p272 = scmp.eq.s32.totalorder %s24, 1
      %p273 = scmp.ne.s32.totalorder %s268, %s270
      %p274 = scmp.eq.s32.totalorder %s24, 0
      %p275 = por %p273, %p274
      %p276 = scmp.ne.s32.totalorder %s268, %s270
      %p277 = scmp.eq.s32.totalorder %s29, 1
      %p278 = por %p276, %p277
      %p279 = scmp.ne.s32.totalorder %s270, %s271
      %p280 = scmp.eq.s32.totalorder %s29, 0
      %p281 = por %p279, %p280
      %p282 = scmp.ne.s32.totalorder %s270, %s271
      %p283 = scmp.eq.s32.totalorder %s30, 1
      %p284 = por %p282, %p283
      %p286 = scmp.ne.s32.totalorder %s271, %s285
      %p287 = scmp.eq.s32.totalorder %s30, 0
      %p288 = por %p286, %p287
      %s289 = ssub.s32 %s24, %s31
      %p290 = scmp.eq.s32.totalorder %s289, 0
      %s292 = sadd.s32 %s291, 1
      %s293 = scalar_select %p290, %s291, %s292
      %p296 = pneg %p290
      %p297 = scmp.eq.s32.totalorder %s24, 1
      %p298 = por %p296, %p297
      %p299 = scmp.ne.s32.totalorder %s291, %s294
      %p300 = scmp.eq.s32.totalorder %s24, 0
      %p301 = por %p299, %p300
      %p302 = scmp.ne.s32.totalorder %s291, %s294
      %p303 = scmp.eq.s32.totalorder %s29, 1
      %p304 = por %p302, %p303
      %p305 = scmp.ne.s32.totalorder %s294, %s295
      %p306 = scmp.eq.s32.totalorder %s29, 0
      %p307 = por %p305, %p306
      %p308 = scmp.ne.s32.totalorder %s294, %s295
      %p309 = scmp.eq.s32.totalorder %s30, 1
      %p310 = por %p308, %p309
      %p312 = scmp.ne.s32.totalorder %s295, %s311
      %p313 = scmp.eq.s32.totalorder %s30, 0
      %p314 = por %p312, %p313
      %p315 = scmp.le.s32.totalorder 1, %s24
      %p316 = scmp.lt.s32.totalorder %s24, 3
      %p317 = pnand %p315, %p316
      %p318 = pneg %p317
      // Predicated region
      $region9: #{tpu_custom_call.1} parent=5 // pred_check
        _
      $region10: #{tpu_custom_call.1} parent=5 // pred_check_branch
        %320 = sbr.rel (%p317) target = $region12
      $region11: #{tpu_custom_call.1} parent=5 // pred_region
        %s321 = ssub.s32 %s24, 1
        // Predicated region
        $region13: #{tpu_custom_call.1} parent=11 // pred_check
          %p322 = pneg %p71
        $region14: #{tpu_custom_call.1} parent=11 // pred_check_branch
          %324 = sbr.rel (%p322) target = $region16
        $region15: #{tpu_custom_call.1} parent=11 // pred_region
          %326 = vsyncadd [#allocation3], 0
          %s328 = sshll.u32 %s1, 4
          %s329 = int_to_ptr.hbm [resolvable:$true] %s328
          %s330 = sshll.u32 [#allocation2], 4
          %s331 = int_to_ptr.vmem [resolvable:$true] %s330
          %333 = dma.hbm_to_vmem [thread:$0]  %s329, 16, %s331, [#allocation3]
        $region16: #{tpu_custom_call.1} parent=11 // pred_fallthru
          _
        // Predicated region
        $region17: #{tpu_custom_call.1} parent=11 // pred_check
          %p334 = pneg %p92
        $region18: #{tpu_custom_call.1} parent=11 // pred_check_branch
          %336 = sbr.rel (%p334) target = $region20
        $region19: #{tpu_custom_call.1} parent=11 // pred_region
          %338 = vsyncadd [#allocation6], 0
          %s340 = sshll.u32 %s2, 4
          %s341 = int_to_ptr.hbm [resolvable:$true] %s340
          %s342 = sshll.u32 [#allocation5], 4
          %s343 = int_to_ptr.vmem [resolvable:$true] %s342
          %345 = dma.hbm_to_vmem [thread:$0]  %s341, 16, %s343, [#allocation6]
        $region20: #{tpu_custom_call.1} parent=11 // pred_fallthru
          _
        // Predicated region
        $region21: #{tpu_custom_call.1} parent=11 // pred_check
          %p346 = pneg %p113
        $region22: #{tpu_custom_call.1} parent=11 // pred_check_branch
          %348 = sbr.rel (%p346) target = $region24
        $region23: #{tpu_custom_call.1} parent=11 // pred_region
          _
        $region24: #{tpu_custom_call.1} parent=11 // pred_fallthru
          _
        // Predicated region
        $region25: #{tpu_custom_call.1} parent=11 // pred_check
          %p349 = pneg %p134
        $region26: #{tpu_custom_call.1} parent=11 // pred_check_branch
          %351 = sbr.rel (%p349) target = $region28
        $region27: #{tpu_custom_call.1} parent=11 // pred_region
          %353 = vsyncadd [#allocation6], 0
          %s354 = sshll.u32 %s4, 4
          %s355 = int_to_ptr.hbm [resolvable:$true] %s354
          %s356 = sshll.u32 [#allocation7], 4
          %s357 = int_to_ptr.vmem [resolvable:$true] %s356
          %362 = dma.hbm_to_vmem [thread:$0]  %s355, 512, %s357, [#allocation6], 64, 64, 4
        $region28: #{tpu_custom_call.1} parent=11 // pred_fallthru
          _
        // Predicated region
        $region29: #{tpu_custom_call.1} parent=11 // pred_check
          %p363 = pneg %p155
        $region30: #{tpu_custom_call.1} parent=11 // pred_check_branch
          %365 = sbr.rel (%p363) target = $region32
        $region31: #{tpu_custom_call.1} parent=11 // pred_region
          %367 = vsyncadd [#allocation9], 0
          %s369 = sshll.u32 %s5, 4
          %s370 = int_to_ptr.hbm [resolvable:$true] %s369
          %s371 = sshll.u32 [#allocation8], 4
          %s372 = int_to_ptr.vmem [resolvable:$true] %s371
          %374 = dma.hbm_to_vmem [thread:$0]  %s370, 16, %s372, [#allocation9]
        $region32: #{tpu_custom_call.1} parent=11 // pred_fallthru
          _
        // Predicated region
        $region33: #{tpu_custom_call.1} parent=11 // pred_check
          %p375 = pneg %p176
        $region34: #{tpu_custom_call.1} parent=11 // pred_check_branch
          %377 = sbr.rel (%p375) target = $region36
        $region35: #{tpu_custom_call.1} parent=11 // pred_region
          _
        $region36: #{tpu_custom_call.1} parent=11 // pred_fallthru
          _
        // Predicated region
        $region37: #{tpu_custom_call.1} parent=11 // pred_check
          %p378 = pneg %p197
        $region38: #{tpu_custom_call.1} parent=11 // pred_check_branch
          %380 = sbr.rel (%p378) target = $region40
        $region39: #{tpu_custom_call.1} parent=11 // pred_region
          _
        $region40: #{tpu_custom_call.1} parent=11 // pred_fallthru
          _
        // Predicated region
        $region41: #{tpu_custom_call.1} parent=11 // pred_check
          %p381 = pneg %p218
        $region42: #{tpu_custom_call.1} parent=11 // pred_check_branch
          %383 = sbr.rel (%p381) target = $region44
        $region43: #{tpu_custom_call.1} parent=11 // pred_region
          _
        $region44: #{tpu_custom_call.1} parent=11 // pred_fallthru
          _
        // Predicated region
        $region45: #{tpu_custom_call.1} parent=11 // pred_check
          %p384 = pneg %p239
        $region46: #{tpu_custom_call.1} parent=11 // pred_check_branch
          %386 = sbr.rel (%p384) target = $region48
        $region47: #{tpu_custom_call.1} parent=11 // pred_region
          _
        $region48: #{tpu_custom_call.1} parent=11 // pred_fallthru
          _
        // Predicated region
        $region49: #{tpu_custom_call.1} parent=11 // pred_check
          %p387 = pneg %p260
        $region50: #{tpu_custom_call.1} parent=11 // pred_check_branch
          %389 = sbr.rel (%p387) target = $region52
        $region51: #{tpu_custom_call.1} parent=11 // pred_region
          _
        $region52: #{tpu_custom_call.1} parent=11 // pred_fallthru
          _
        // Predicated region
        $region53: #{tpu_custom_call.1} parent=11 // pred_check
          %p390 = pneg %p281
        $region54: #{tpu_custom_call.1} parent=11 // pred_check_branch
          %392 = sbr.rel (%p390) target = $region56
        $region55: #{tpu_custom_call.1} parent=11 // pred_region
          _
        $region56: #{tpu_custom_call.1} parent=11 // pred_fallthru
          _
      $region12: #{tpu_custom_call.1} parent=5 // pred_fallthru
        _
      %p393 = scmp.lt.s32.totalorder %s24, 2
      // Predicated region
      $region57: #{tpu_custom_call.1} parent=5 // pred_check
        %p394 = pneg %p393
      $region58: #{tpu_custom_call.1} parent=5 // pred_check_branch
        %396 = sbr.rel (%p394) target = $region60
      $region59: #{tpu_custom_call.1} parent=5 // pred_region
        // Predicated region
        $region61: #{tpu_custom_call.1} parent=59 // pred_check
          %p397 = pneg %p44
        $region62: #{tpu_custom_call.1} parent=59 // pred_check_branch
          %399 = sbr.rel (%p397) target = $region64
        $region63: #{tpu_custom_call.1} parent=59 // pred_region
          %s400 = smul.u32 2, %s24
          %p401 = scmp.lt.s32.totalorder %s400, 3
          %s402 = scalar_select %p401, %s400, 3
          %s403 = smul.addr %s402, 2
          %s404 = smul.addr %s403, 8
          %s405 = scalar_lea.vmem %s0, %s404
          %s406 = smul.u32 2, %s24
        $region64: #{tpu_custom_call.1} parent=59 // pred_fallthru
          _
      $region60: #{tpu_custom_call.1} parent=5 // pred_fallthru
        _
      %p407 = scmp.le.s32.totalorder 1, %s24
      %p408 = scmp.lt.s32.totalorder %s24, 3
      %p409 = pnand %p407, %p408
      %p410 = pneg %p409
      // Predicated region
      $region65: #{tpu_custom_call.1} parent=5 // pred_check
        _
      $region66: #{tpu_custom_call.1} parent=5 // pred_check_branch
        %412 = sbr.rel (%p409) target = $region68
      $region67: #{tpu_custom_call.1} parent=5 // pred_region
        %s413 = ssub.s32 %s24, 1
        // Predicated region
        $region69: #{tpu_custom_call.1} parent=67 // pred_check
          %p414 = pneg %p71
        $region70: #{tpu_custom_call.1} parent=67 // pred_check_branch
          %416 = sbr.rel (%p414) target = $region72
        $region71: #{tpu_custom_call.1} parent=67 // pred_region
          %418 = dma.done [#allocation3], 16
        $region72: #{tpu_custom_call.1} parent=67 // pred_fallthru
          _
        // Predicated region
        $region73: #{tpu_custom_call.1} parent=67 // pred_check
          %p419 = pneg %p92
        $region74: #{tpu_custom_call.1} parent=67 // pred_check_branch
          %421 = sbr.rel (%p419) target = $region76
        $region75: #{tpu_custom_call.1} parent=67 // pred_region
          %423 = dma.done [#allocation6], 16
        $region76: #{tpu_custom_call.1} parent=67 // pred_fallthru
          _
        // Predicated region
        $region77: #{tpu_custom_call.1} parent=67 // pred_check
          %p424 = pneg %p134
        $region78: #{tpu_custom_call.1} parent=67 // pred_check_branch
          %426 = sbr.rel (%p424) target = $region80
        $region79: #{tpu_custom_call.1} parent=67 // pred_region
          %428 = dma.done [#allocation6], 512
        $region80: #{tpu_custom_call.1} parent=67 // pred_fallthru
          _
        // Predicated region
        $region81: #{tpu_custom_call.1} parent=67 // pred_check
          %p429 = pneg %p155
        $region82: #{tpu_custom_call.1} parent=67 // pred_check_branch
          %431 = sbr.rel (%p429) target = $region84
        $region83: #{tpu_custom_call.1} parent=67 // pred_region
          %433 = dma.done [#allocation9], 16
        $region84: #{tpu_custom_call.1} parent=67 // pred_fallthru
          _
        %s434 = smul.u32 2, %s29
        %p435 = scmp.lt.s32.totalorder %s434, 3
        %s436 = scalar_select %p435, %s434, 3
        %s437 = smul.addr %s436, 2
        %s438 = smul.addr %s437, 8
        %s439 = scalar_lea.vmem %s0, %s438
        %p440 = pneg %p50
        %p441 = pneg %p47
        %p442 = pneg %p71
        %p443 = pneg %p68
        %p444 = pneg %p92
        %p445 = pneg %p89
        %p446 = pneg %p113
        %p447 = pneg %p110
        %p448 = pneg %p134
        %p449 = pneg %p131
        %p450 = pneg %p155
        %p451 = pneg %p152
        %p452 = pneg %p176
        %p453 = pneg %p173
        %p454 = pneg %p197
        %p455 = pneg %p194
        %p456 = pneg %p218
        %p457 = pneg %p215
        %p458 = pneg %p239
        %p459 = pneg %p236
        %p460 = pneg %p260
        %p461 = pneg %p257
        %p462 = pneg %p281
        %p463 = pneg %p278
        %p464 = pneg %p307
        %p465 = pneg %p304
        %s466 = sand.u32 %s294, 1
        %s467 = scalar_lea.sflag [#allocation4], %s466
        %s468 = sand.u32 %s294, 1
        %s469 = smul.addr %s468, 32
        %s470 = scalar_lea.vmem [#allocation10], %s469
        %s471 = smul.u32 2, %s29
        %p472 = scmp.lt.s32.totalorder %s471, 3
        %s473 = scalar_select %p472, %s471, 3
        %s474 = smul.addr %s473, 2
        %s475 = smul.addr %s474, 8
        %s476 = scalar_lea.vmem %s0, %s475
        %s477 = smul.u32 2, %s29
        %s478 = smul.u32 2, %s29
        %v480 = vld [vmem:[%s476] sm:$0xff]
        %v481 = vld [vmem:[%s476 + $0x8] sm:$0xff]
        %v482 = vld [vmem:[%s476 + $0x10] sm:$0xff]
        %v483 = vld [vmem:[%s476 + $0x18] sm:$0xff]
        %v484 = vld [vmem:[#allocation2] sm:$0x1]
        %v485 = vld [vmem:[#allocation5] sm:$0x1]
        %vm486 = vcmask 523264
        %v487 = vsel %vm486, %v480, 0.0
        %488 = vadd.xlane.f32.xlu0 %v487
        %v489 = vpop.xlane.xlu0 %488
        %v490 = vsel %vm486, %v481, 0.0
        %491 = vadd.xlane.f32.xlu0 %v490
        %v492 = vpop.xlane.xlu0 %491
        %v493 = vsel %vm486, %v482, 0.0
        %494 = vadd.xlane.f32.xlu0 %v493
        %v495 = vpop.xlane.xlu0 %494
        %v496 = vsel %vm486, %v483, 0.0
        %497 = vadd.xlane.f32.xlu0 %v496
        %v498 = vpop.xlane.xlu0 %497
        %v499 = vrcp.pop 64.0
        %v500 = vmul.f32 64.0, %v499
        %v501 = vsub.f32 1.0, %v500
        %v502 = vmul.f32 %v499, %v501
        %v503 = vadd.f32 %v499, %v502
        %vm504 = vweird.f32 %v499
        %v505 = vsel %vm504, %v499, %v503
        %v506 = vmul.f32 %v489, %v505
        %v507 = vmul.f32 %v492, %v505
        %v508 = vmul.f32 %v495, %v505
        %v509 = vmul.f32 %v498, %v505
        %v510 = vsub.f32 %v480, %v506
        %v511 = vsub.f32 %v481, %v507
        %v512 = vsub.f32 %v482, %v508
        %v513 = vsub.f32 %v483, %v509
        %v514 = vmul.f32 %v510, %v510
        %v515 = vmul.f32 %v511, %v511
        %v516 = vmul.f32 %v512, %v512
        %v517 = vmul.f32 %v513, %v513
        %v518 = vsel %vm486, %v514, 0.0
        %519 = vadd.xlane.f32.xlu0 %v518
        %v520 = vpop.xlane.xlu0 %519
        %v521 = vsel %vm486, %v515, 0.0
        %522 = vadd.xlane.f32.xlu0 %v521
        %v523 = vpop.xlane.xlu0 %522
        %v524 = vsel %vm486, %v516, 0.0
        %525 = vadd.xlane.f32.xlu0 %v524
        %v526 = vpop.xlane.xlu0 %525
        %v527 = vsel %vm486, %v517, 0.0
        %528 = vadd.xlane.f32.xlu0 %v527
        %v529 = vpop.xlane.xlu0 %528
        %v530 = vmul.f32 %v520, %v505
        %v531 = vmul.f32 %v523, %v505
        %v532 = vmul.f32 %v526, %v505
        %v533 = vmul.f32 %v529, %v505
        %v534 = vadd.f32 %v530, 1e-05
        %v535 = vadd.f32 %v531, 1e-05
        %v536 = vadd.f32 %v532, 1e-05
        %v537 = vadd.f32 %v533, 1e-05
        %v538 = vrsqrt.pop %v534
        %v539 = vmul.f32 %v538, %v534
        %v540 = vmul.f32 %v539, %v538
        %v541 = vmul.f32 0.5, %v540
        %v542 = vsub.f32 1.5, %v541
        %v543 = vmul.f32 %v538, %v542
        %vm544 = vweird.f32 %v534
        %vm545 = vweird.f32 %v538
        %vm546 = vmor %vm544, %vm545
        %v547 = vsel %vm546, %v538, %v543
        %v548 = vrsqrt.pop %v535
        %v549 = vmul.f32 %v548, %v535
        %v550 = vmul.f32 %v549, %v548
        %v551 = vmul.f32 0.5, %v550
        %v552 = vsub.f32 1.5, %v551
        %v553 = vmul.f32 %v548, %v552
        %vm554 = vweird.f32 %v535
        %vm555 = vweird.f32 %v548
        %vm556 = vmor %vm554, %vm555
        %v557 = vsel %vm556, %v548, %v553
        %v558 = vrsqrt.pop %v536
        %v559 = vmul.f32 %v558, %v536
        %v560 = vmul.f32 %v559, %v558
        %v561 = vmul.f32 0.5, %v560
        %v562 = vsub.f32 1.5, %v561
        %v563 = vmul.f32 %v558, %v562
        %vm564 = vweird.f32 %v536
        %vm565 = vweird.f32 %v558
        %vm566 = vmor %vm564, %vm565
        %v567 = vsel %vm566, %v558, %v563
        %v568 = vrsqrt.pop %v537
        %v569 = vmul.f32 %v568, %v537
        %v570 = vmul.f32 %v569, %v568
        %v571 = vmul.f32 0.5, %v570
        %v572 = vsub.f32 1.5, %v571
        %v573 = vmul.f32 %v568, %v572
        %vm574 = vweird.f32 %v537
        %vm575 = vweird.f32 %v568
        %vm576 = vmor %vm574, %vm575
        %v577 = vsel %vm576, %v568, %v573
        %v578 = vmul.f32 %v510, %v547
        %v579 = vmul.f32 %v511, %v557
        %v580 = vmul.f32 %v512, %v567
        %v581 = vmul.f32 %v513, %v577
        %v583 = vperm.slane %v484, 0
        %v585 = vmul.f32 %v578, %v583
        %v586 = vmul.f32 %v579, %v583
        %v587 = vmul.f32 %v580, %v583
        %v588 = vmul.f32 %v581, %v583
        %v590 = vperm.slane %v485, 0
        %v592 = vadd.f32 %v585, %v590
        %v593 = vadd.f32 %v586, %v590
        %v594 = vadd.f32 %v587, %v590
        %v595 = vadd.f32 %v588, %v590
        %v596 = vpack.c.bf16 %v593, %v592
        %v597 = vpack.c.bf16 %v595, %v594
        %v598 = vld [vmem:[%s3] sm:$0xff]
        %v599 = vld [vmem:[%s3 + $0x8] sm:$0xff]
        %v600 = vld [vmem:[%s3 + $0x10] sm:$0xff]
        %v601 = vld [vmem:[%s3 + $0x18] sm:$0xff]
        %v602 = vld [vmem:[%s3 + $0x20] sm:$0xff]
        %v603 = vld [vmem:[%s3 + $0x28] sm:$0xff]
        %v604 = vld [vmem:[%s3 + $0x30] sm:$0xff]
        %v605 = vld [vmem:[%s3 + $0x38] sm:$0xff]
        %v614 = vunpack.c.l.b16 %v598
        %v615 = vunpack.c.h.b16 %v598
        %v616 = vunpack.c.l.b16 %v599
        %v617 = vunpack.c.h.b16 %v599
        %v618 = vunpack.c.l.b16 %v600
        %v619 = vunpack.c.h.b16 %v600
        %v620 = vunpack.c.l.b16 %v601
        %v621 = vunpack.c.h.b16 %v601
        %v622 = vunpack.c.l.b16 %v602
        %v623 = vunpack.c.h.b16 %v602
        %v624 = vunpack.c.l.b16 %v603
        %v625 = vunpack.c.h.b16 %v603
        %v626 = vunpack.c.l.b16 %v604
        %v627 = vunpack.c.h.b16 %v604
        %v628 = vunpack.c.l.b16 %v605
        %v629 = vunpack.c.h.b16 %v605
        %v630 = vpack.c.b16 %v616, %v614
        %v631 = vpack.c.b16 %v617, %v615
        %v632 = vpack.c.b16 %v620, %v618
        %v633 = vpack.c.b16 %v621, %v619
        %v634 = vpack.c.b16 %v624, %v622
        %v635 = vpack.c.b16 %v625, %v623
        %v636 = vpack.c.b16 %v628, %v626
        %v637 = vpack.c.b16 %v629, %v627
        %v647 = vsel %vm486, %v596, 0
        %v650 = vsel %vm486, %v597, 0
        %652 = vmatpush.bf16.msra.mxu0 0
        %653 = vmatpush.bf16.msra.mxu0 0
        %654 = vmatpush.bf16.msra.mxu0 0
        %655 = vmatpush.bf16.msra.mxu0 0
        %656 = vmatpush.bf16.msra.mxu0 %v636
        %657 = vmatpush.bf16.msra.mxu0 %v634
        %658 = vmatpush.bf16.msra.mxu0 %v632
        %659 = vmatpush.bf16.msra.mxu0 %v630
        %660 = vmatmul.bf16.gmra.mxu0 %v647
        %v661 = vpop.f32.mrf.mxu0
        %v662 = vadd.f32 0.0, %v661
        %v663 = vpop.f32.mrf.mxu0
        %v664 = vadd.f32 0.0, %v663
        %665 = vmatmul.bf16.gmra.mxu0 %v650
        %v666 = vpop.f32.mrf.mxu0
        %v667 = vadd.f32 0.0, %v666
        %v668 = vpop.f32.mrf.mxu0
        %v669 = vadd.f32 0.0, %v668
        %670 = vdwg.mxu0
        %671 = vmatpush.bf16.msra.mxu0 0
        %672 = vmatpush.bf16.msra.mxu0 0
        %673 = vmatpush.bf16.msra.mxu0 0
        %674 = vmatpush.bf16.msra.mxu0 0
        %675 = vmatpush.bf16.msra.mxu0 %v637
        %676 = vmatpush.bf16.msra.mxu0 %v635
        %677 = vmatpush.bf16.msra.mxu0 %v633
        %678 = vmatpush.bf16.msra.mxu0 %v631
        %679 = vmatmul.bf16.gmra.mxu0 %v647
        %v680 = vpop.f32.mrf.mxu0
        %v681 = vadd.f32 0.0, %v680
        %v682 = vpop.f32.mrf.mxu0
        %v683 = vadd.f32 0.0, %v682
        %684 = vmatmul.bf16.gmra.mxu0 %v650
        %v685 = vpop.f32.mrf.mxu0
        %v686 = vadd.f32 0.0, %v685
        %v687 = vpop.f32.mrf.mxu0
        %v688 = vadd.f32 0.0, %v687
        %689 = vdwg.mxu0
        %v690 = vmul.f32 %v662, 0.25
        %v691 = vmul.f32 %v664, 0.25
        %v692 = vmul.f32 %v667, 0.25
        %v693 = vmul.f32 %v669, 0.25
        %v694 = vpack.c.bf16 %v690, %v690
        %v695 = vpack.c.bf16 %v691, %v691
        %v696 = vpack.c.bf16 %v692, %v692
        %v697 = vpack.c.bf16 %v693, %v693
        %v698 = vpack.c.bf16 %v662, %v662
        %v699 = vpack.c.bf16 %v664, %v664
        %v700 = vpack.c.bf16 %v667, %v667
        %v701 = vpack.c.bf16 %v669, %v669
        %v702 = vpack.c.bf16 %v681, %v681
        %v703 = vpack.c.bf16 %v683, %v683
        %v704 = vpack.c.bf16 %v686, %v686
        %v705 = vpack.c.bf16 %v688, %v688
        %v706 = vlaneseq
        %v707 = vshrl.u32 %v706, 7
        %v708 = vadd.s32 %v707, 8
        %v709 = vlaneseq
        %v710 = vand.u32 %v709, 127
        %vm711 = vcmp.le.s32.totalorder %v710, %v707
        %vm712 = vcmp.le.s32.totalorder %v710, %v708
        %v715 = vunpack.c.l.b16 %v694
        %v716 = vunpack.c.l.b16 %v695
        %v717 = vpack.c.b16 %v716, %v715
        %v720 = vunpack.c.l.b16 %v698
        %v721 = vunpack.c.l.b16 %v699
        %v722 = vpack.c.b16 %v721, %v720
        %723 = vrot.lane.b32.xlu0 %v722, 64
        %v724 = vpop.permute.xlu0 %723
        %vm725 = vcmask 130048
        %v727 = vsel %vm725, %v717, 0
        %v730 = vsel %vm725, %v724, 0
        %732 = vmatpush.bf16.xpose.msra.mxu0 0
        %733 = vmatpush.bf16.xpose.msra.mxu0 0
        %734 = vmatpush.bf16.xpose.msra.mxu0 0
        %735 = vmatpush.bf16.xpose.msra.mxu0 0
        %736 = vmatpush.bf16.xpose.msra.mxu0 0
        %737 = vmatpush.bf16.xpose.msra.mxu0 0
        %738 = vmatpush.bf16.xpose.msra.mxu0 0
        %739 = vmatpush.bf16.xpose.msra.mxu0 %v730
        %740 = vmatmul.bf16.gmra.mxu0 %v727
        %v741 = vpop.f32.mrf.mxu0
        %v742 = vadd.f32 0.0, %v741
        %v743 = vpop.f32.mrf.mxu0
        %v744 = vadd.f32 0.0, %v743
        %745 = vdwg.mxu0
        %v748 = vunpack.c.l.b16 %v696
        %v749 = vunpack.c.l.b16 %v697
        %v750 = vpack.c.b16 %v749, %v748
        %v753 = vunpack.c.l.b16 %v700
        %v754 = vunpack.c.l.b16 %v701
        %v755 = vpack.c.b16 %v754, %v753
        %756 = vrot.lane.b32.xlu0 %v755, 64
        %v757 = vpop.permute.xlu0 %756
        %v759 = vsel %vm725, %v750, 0
        %v762 = vsel %vm725, %v757, 0
        %764 = vmatpush.bf16.xpose.msra.mxu0 0
        %765 = vmatpush.bf16.xpose.msra.mxu0 0
        %766 = vmatpush.bf16.xpose.msra.mxu0 0
        %767 = vmatpush.bf16.xpose.msra.mxu0 0
        %768 = vmatpush.bf16.xpose.msra.mxu0 0
        %769 = vmatpush.bf16.xpose.msra.mxu0 0
        %770 = vmatpush.bf16.xpose.msra.mxu0 0
        %771 = vmatpush.bf16.xpose.msra.mxu0 %v762
        %772 = vmatmul.bf16.gmra.mxu0 %v759
        %v773 = vpop.f32.mrf.mxu0
        %v774 = vadd.f32 0.0, %v773
        %v775 = vpop.f32.mrf.mxu0
        %v776 = vadd.f32 0.0, %v775
        %777 = vdwg.mxu0
        %v778 = vsel %vm711, 1, 0
        %v779 = vsel %vm712, 1, 0
        %vm780 = vcmp.eq.s32.totalorder %v778, 1
        %vm781 = vcmp.eq.s32.totalorder %v779, 1
        %v782 = vsel %vm780, %v742, -1e+30
        %v783 = vsel %vm781, %v744, -1e+30
        %v784 = vsel %vm780, %v774, -1e+30
        %v785 = vsel %vm781, %v776, -1e+30
        %v786 = vsel %vm725, %v782, -inf
        %787 = vmax.xlane.f32.xlu0 %v786
        %v788 = vpop.xlane.xlu0 %787
        %v789 = vsel %vm725, %v783, -inf
        %790 = vmax.xlane.f32.xlu0 %v789
        %v791 = vpop.xlane.xlu0 %790
        %v792 = vsel %vm725, %v784, -inf
        %793 = vmax.xlane.f32.xlu0 %v792
        %v794 = vpop.xlane.xlu0 %793
        %v795 = vsel %vm725, %v785, -inf
        %796 = vmax.xlane.f32.xlu0 %v795
        %v797 = vpop.xlane.xlu0 %796
        %v798 = vsub.f32 %v782, %v788
        %v799 = vsub.f32 %v783, %v791
        %v800 = vsub.f32 %v784, %v794
        %v801 = vsub.f32 %v785, %v797
        %v802 = vmul.f32 %v798, 1.442695
        %v803 = vpow.pop %v802
        %v804 = vmul.f32 %v799, 1.442695
        %v805 = vpow.pop %v804
        %v806 = vmul.f32 %v800, 1.442695
        %v807 = vpow.pop %v806
        %v808 = vmul.f32 %v801, 1.442695
        %v809 = vpow.pop %v808
        %v810 = vsel %vm725, %v803, 0.0
        %811 = vadd.xlane.f32.xlu0 %v810
        %v812 = vpop.xlane.xlu0 %811
        %v813 = vsel %vm725, %v805, 0.0
        %814 = vadd.xlane.f32.xlu0 %v813
        %v815 = vpop.xlane.xlu0 %814
        %v816 = vsel %vm725, %v807, 0.0
        %817 = vadd.xlane.f32.xlu0 %v816
        %v818 = vpop.xlane.xlu0 %817
        %v819 = vsel %vm725, %v809, 0.0
        %820 = vadd.xlane.f32.xlu0 %v819
        %v821 = vpop.xlane.xlu0 %820
        %v822 = vrcp.pop %v812
        %v823 = vrcp.pop %v815
        %v824 = vrcp.pop %v818
        %v825 = vrcp.pop %v821
        %v826 = vmul.f32 %v803, %v822
        %v827 = vmul.f32 %v805, %v823
        %v828 = vmul.f32 %v807, %v824
        %v829 = vmul.f32 %v809, %v825
        %v830 = vpack.c.bf16 %v826, %v826
        %v831 = vpack.c.bf16 %v827, %v827
        %v832 = vpack.c.bf16 %v828, %v828
        %v833 = vpack.c.bf16 %v829, %v829
        %v836 = vunpack.c.l.b16 %v830
        %v837 = vunpack.c.l.b16 %v831
        %v838 = vpack.c.b16 %v837, %v836
        %v841 = vunpack.c.l.b16 %v702
        %v842 = vunpack.c.l.b16 %v703
        %v843 = vpack.c.b16 %v842, %v841
        %v846 = vsel %vm725, %v838, 0
        %848 = vmatpush.bf16.msra.mxu0 0
        %849 = vmatpush.bf16.msra.mxu0 0
        %850 = vmatpush.bf16.msra.mxu0 0
        %851 = vmatpush.bf16.msra.mxu0 0
        %852 = vmatpush.bf16.msra.mxu0 0
        %853 = vmatpush.bf16.msra.mxu0 0
        %854 = vmatpush.bf16.msra.mxu0 0
        %855 = vmatpush.bf16.msra.mxu0 %v843
        %856 = vmatmul.bf16.gmra.mxu0 %v846
        %v857 = vpop.f32.mrf.mxu0
        %v858 = vadd.f32 0.0, %v857
        %v859 = vpop.f32.mrf.mxu0
        %v860 = vadd.f32 0.0, %v859
        %861 = vdwg.mxu0
        %v864 = vunpack.c.l.b16 %v832
        %v865 = vunpack.c.l.b16 %v833
        %v866 = vpack.c.b16 %v865, %v864
        %v869 = vunpack.c.l.b16 %v704
        %v870 = vunpack.c.l.b16 %v705
        %v871 = vpack.c.b16 %v870, %v869
        %v874 = vsel %vm725, %v866, 0
        %876 = vmatpush.bf16.msra.mxu0 0
        %877 = vmatpush.bf16.msra.mxu0 0
        %878 = vmatpush.bf16.msra.mxu0 0
        %879 = vmatpush.bf16.msra.mxu0 0
        %880 = vmatpush.bf16.msra.mxu0 0
        %881 = vmatpush.bf16.msra.mxu0 0
        %882 = vmatpush.bf16.msra.mxu0 0
        %883 = vmatpush.bf16.msra.mxu0 %v871
        %884 = vmatmul.bf16.gmra.mxu0 %v874
        %v885 = vpop.f32.mrf.mxu0
        %v886 = vadd.f32 0.0, %v885
        %v887 = vpop.f32.mrf.mxu0
        %v888 = vadd.f32 0.0, %v887
        %889 = vdwg.mxu0
        %890 = vrot.lane.b32.xlu0 %v717, 112
        %v891 = vpop.permute.xlu0 %890
        %892 = vrot.lane.b32.xlu0 %v722, 48
        %v893 = vpop.permute.xlu0 %892
        %v895 = vsel %vm725, %v891, 0
        %v898 = vsel %vm725, %v893, 0
        %900 = vmatpush.bf16.xpose.msra.mxu0 0
        %901 = vmatpush.bf16.xpose.msra.mxu0 0
        %902 = vmatpush.bf16.xpose.msra.mxu0 0
        %903 = vmatpush.bf16.xpose.msra.mxu0 0
        %904 = vmatpush.bf16.xpose.msra.mxu0 0
        %905 = vmatpush.bf16.xpose.msra.mxu0 0
        %906 = vmatpush.bf16.xpose.msra.mxu0 0
        %907 = vmatpush.bf16.xpose.msra.mxu0 %v898
        %908 = vmatmul.bf16.gmra.mxu0 %v895
        %v909 = vpop.f32.mrf.mxu0
        %v910 = vadd.f32 0.0, %v909
        %v911 = vpop.f32.mrf.mxu0
        %v912 = vadd.f32 0.0, %v911
        %913 = vdwg.mxu0
        %914 = vrot.lane.b32.xlu0 %v750, 112
        %v915 = vpop.permute.xlu0 %914
        %916 = vrot.lane.b32.xlu0 %v755, 48
        %v917 = vpop.permute.xlu0 %916
        %v919 = vsel %vm725, %v915, 0
        %v922 = vsel %vm725, %v917, 0
        %924 = vmatpush.bf16.xpose.msra.mxu0 0
        %925 = vmatpush.bf16.xpose.msra.mxu0 0
        %926 = vmatpush.bf16.xpose.msra.mxu0 0
        %927 = vmatpush.bf16.xpose.msra.mxu0 0
        %928 = vmatpush.bf16.xpose.msra.mxu0 0
        %929 = vmatpush.bf16.xpose.msra.mxu0 0
        %930 = vmatpush.bf16.xpose.msra.mxu0 0
        %931 = vmatpush.bf16.xpose.msra.mxu0 %v922
        %932 = vmatmul.bf16.gmra.mxu0 %v919
        %v933 = vpop.f32.mrf.mxu0
        %v934 = vadd.f32 0.0, %v933
        %v935 = vpop.f32.mrf.mxu0
        %v936 = vadd.f32 0.0, %v935
        %937 = vdwg.mxu0
        %v938 = vsel %vm780, %v910, -1e+30
        %v939 = vsel %vm781, %v912, -1e+30
        %v940 = vsel %vm780, %v934, -1e+30
        %v941 = vsel %vm781, %v936, -1e+30
        %v942 = vsel %vm725, %v938, -inf
        %943 = vmax.xlane.f32.xlu0 %v942
        %v944 = vpop.xlane.xlu0 %943
        %v945 = vsel %vm725, %v939, -inf
        %946 = vmax.xlane.f32.xlu0 %v945
        %v947 = vpop.xlane.xlu0 %946
        %v948 = vsel %vm725, %v940, -inf
        %949 = vmax.xlane.f32.xlu0 %v948
        %v950 = vpop.xlane.xlu0 %949
        %v951 = vsel %vm725, %v941, -inf
        %952 = vmax.xlane.f32.xlu0 %v951
        %v953 = vpop.xlane.xlu0 %952
        %v954 = vsub.f32 %v938, %v944
        %v955 = vsub.f32 %v939, %v947
        %v956 = vsub.f32 %v940, %v950
        %v957 = vsub.f32 %v941, %v953
        %v958 = vmul.f32 %v954, 1.442695
        %v959 = vpow.pop %v958
        %v960 = vmul.f32 %v955, 1.442695
        %v961 = vpow.pop %v960
        %v962 = vmul.f32 %v956, 1.442695
        %v963 = vpow.pop %v962
        %v964 = vmul.f32 %v957, 1.442695
        %v965 = vpow.pop %v964
        %v966 = vsel %vm725, %v959, 0.0
        %967 = vadd.xlane.f32.xlu0 %v966
        %v968 = vpop.xlane.xlu0 %967
        %v969 = vsel %vm725, %v961, 0.0
        %970 = vadd.xlane.f32.xlu0 %v969
        %v971 = vpop.xlane.xlu0 %970
        %v972 = vsel %vm725, %v963, 0.0
        %973 = vadd.xlane.f32.xlu0 %v972
        %v974 = vpop.xlane.xlu0 %973
        %v975 = vsel %vm725, %v965, 0.0
        %976 = vadd.xlane.f32.xlu0 %v975
        %v977 = vpop.xlane.xlu0 %976
        %v978 = vrcp.pop %v968
        %v979 = vrcp.pop %v971
        %v980 = vrcp.pop %v974
        %v981 = vrcp.pop %v977
        %v982 = vmul.f32 %v959, %v978
        %v983 = vmul.f32 %v961, %v979
        %v984 = vmul.f32 %v963, %v980
        %v985 = vmul.f32 %v965, %v981
        %v986 = vpack.c.bf16 %v982, %v982
        %v987 = vpack.c.bf16 %v983, %v983
        %v988 = vpack.c.bf16 %v984, %v984
        %v989 = vpack.c.bf16 %v985, %v985
        %v992 = vunpack.c.l.b16 %v986
        %v993 = vunpack.c.l.b16 %v987
        %v994 = vpack.c.b16 %v993, %v992
        %995 = vrot.lane.b32.xlu0 %v843, 112
        %v996 = vpop.permute.xlu0 %995
        %v999 = vsel %vm725, %v994, 0
        %1001 = vmatpush.bf16.msra.mxu0 0
        %1002 = vmatpush.bf16.msra.mxu0 0
        %1003 = vmatpush.bf16.msra.mxu0 0
        %1004 = vmatpush.bf16.msra.mxu0 0
        %1005 = vmatpush.bf16.msra.mxu0 0
        %1006 = vmatpush.bf16.msra.mxu0 0
        %1007 = vmatpush.bf16.msra.mxu0 0
        %1008 = vmatpush.bf16.msra.mxu0 %v996
        %1009 = vmatmul.bf16.gmra.mxu0 %v999
        %v1010 = vpop.f32.mrf.mxu0
        %v1011 = vadd.f32 0.0, %v1010
        %v1012 = vpop.f32.mrf.mxu0
        %v1013 = vadd.f32 0.0, %v1012
        %1014 = vdwg.mxu0
        %v1017 = vunpack.c.l.b16 %v988
        %v1018 = vunpack.c.l.b16 %v989
        %v1019 = vpack.c.b16 %v1018, %v1017
        %1020 = vrot.lane.b32.xlu0 %v871, 112
        %v1021 = vpop.permute.xlu0 %1020
        %v1024 = vsel %vm725, %v1019, 0
        %1026 = vmatpush.bf16.msra.mxu0 0
        %1027 = vmatpush.bf16.msra.mxu0 0
        %1028 = vmatpush.bf16.msra.mxu0 0
        %1029 = vmatpush.bf16.msra.mxu0 0
        %1030 = vmatpush.bf16.msra.mxu0 0
        %1031 = vmatpush.bf16.msra.mxu0 0
        %1032 = vmatpush.bf16.msra.mxu0 0
        %1033 = vmatpush.bf16.msra.mxu0 %v1021
        %1034 = vmatmul.bf16.gmra.mxu0 %v1024
        %v1035 = vpop.f32.mrf.mxu0
        %v1036 = vadd.f32 0.0, %v1035
        %v1037 = vpop.f32.mrf.mxu0
        %v1038 = vadd.f32 0.0, %v1037
        %1039 = vdwg.mxu0
        %1040 = vrot.lane.b32.xlu0 %v717, 96
        %v1041 = vpop.permute.xlu0 %1040
        %1042 = vrot.lane.b32.xlu0 %v722, 32
        %v1043 = vpop.permute.xlu0 %1042
        %v1045 = vsel %vm725, %v1041, 0
        %v1048 = vsel %vm725, %v1043, 0
        %1050 = vmatpush.bf16.xpose.msra.mxu0 0
        %1051 = vmatpush.bf16.xpose.msra.mxu0 0
        %1052 = vmatpush.bf16.xpose.msra.mxu0 0
        %1053 = vmatpush.bf16.xpose.msra.mxu0 0
        %1054 = vmatpush.bf16.xpose.msra.mxu0 0
        %1055 = vmatpush.bf16.xpose.msra.mxu0 0
        %1056 = vmatpush.bf16.xpose.msra.mxu0 0
        %1057 = vmatpush.bf16.xpose.msra.mxu0 %v1048
        %1058 = vmatmul.bf16.gmra.mxu0 %v1045
        %v1059 = vpop.f32.mrf.mxu0
        %v1060 = vadd.f32 0.0, %v1059
        %v1061 = vpop.f32.mrf.mxu0
        %v1062 = vadd.f32 0.0, %v1061
        %1063 = vdwg.mxu0
        %1064 = vrot.lane.b32.xlu0 %v750, 96
        %v1065 = vpop.permute.xlu0 %1064
        %1066 = vrot.lane.b32.xlu0 %v755, 32
        %v1067 = vpop.permute.xlu0 %1066
        %v1069 = vsel %vm725, %v1065, 0
        %v1072 = vsel %vm725, %v1067, 0
        %1074 = vmatpush.bf16.xpose.msra.mxu0 0
        %1075 = vmatpush.bf16.xpose.msra.mxu0 0
        %1076 = vmatpush.bf16.xpose.msra.mxu0 0
        %1077 = vmatpush.bf16.xpose.msra.mxu0 0
        %1078 = vmatpush.bf16.xpose.msra.mxu0 0
        %1079 = vmatpush.bf16.xpose.msra.mxu0 0
        %1080 = vmatpush.bf16.xpose.msra.mxu0 0
        %1081 = vmatpush.bf16.xpose.msra.mxu0 %v1072
        %1082 = vmatmul.bf16.gmra.mxu0 %v1069
        %v1083 = vpop.f32.mrf.mxu0
        %v1084 = vadd.f32 0.0, %v1083
        %v1085 = vpop.f32.mrf.mxu0
        %v1086 = vadd.f32 0.0, %v1085
        %1087 = vdwg.mxu0
        %v1088 = vsel %vm780, %v1060, -1e+30
        %v1089 = vsel %vm781, %v1062, -1e+30
        %v1090 = vsel %vm780, %v1084, -1e+30
        %v1091 = vsel %vm781, %v1086, -1e+30
        %v1092 = vsel %vm725, %v1088, -inf
        %1093 = vmax.xlane.f32.xlu0 %v1092
        %v1094 = vpop.xlane.xlu0 %1093
        %v1095 = vsel %vm725, %v1089, -inf
        %1096 = vmax.xlane.f32.xlu0 %v1095
        %v1097 = vpop.xlane.xlu0 %1096
        %v1098 = vsel %vm725, %v1090, -inf
        %1099 = vmax.xlane.f32.xlu0 %v1098
        %v1100 = vpop.xlane.xlu0 %1099
        %v1101 = vsel %vm725, %v1091, -inf
        %1102 = vmax.xlane.f32.xlu0 %v1101
        %v1103 = vpop.xlane.xlu0 %1102
        %v1104 = vsub.f32 %v1088, %v1094
        %v1105 = vsub.f32 %v1089, %v1097
        %v1106 = vsub.f32 %v1090, %v1100
        %v1107 = vsub.f32 %v1091, %v1103
        %v1108 = vmul.f32 %v1104, 1.442695
        %v1109 = vpow.pop %v1108
        %v1110 = vmul.f32 %v1105, 1.442695
        %v1111 = vpow.pop %v1110
        %v1112 = vmul.f32 %v1106, 1.442695
        %v1113 = vpow.pop %v1112
        %v1114 = vmul.f32 %v1107, 1.442695
        %v1115 = vpow.pop %v1114
        %v1116 = vsel %vm725, %v1109, 0.0
        %1117 = vadd.xlane.f32.xlu0 %v1116
        %v1118 = vpop.xlane.xlu0 %1117
        %v1119 = vsel %vm725, %v1111, 0.0
        %1120 = vadd.xlane.f32.xlu0 %v1119
        %v1121 = vpop.xlane.xlu0 %1120
        %v1122 = vsel %vm725, %v1113, 0.0
        %1123 = vadd.xlane.f32.xlu0 %v1122
        %v1124 = vpop.xlane.xlu0 %1123
        %v1125 = vsel %vm725, %v1115, 0.0
        %1126 = vadd.xlane.f32.xlu0 %v1125
        %v1127 = vpop.xlane.xlu0 %1126
        %v1128 = vrcp.pop %v1118
        %v1129 = vrcp.pop %v1121
        %v1130 = vrcp.pop %v1124
        %v1131 = vrcp.pop %v1127
        %v1132 = vmul.f32 %v1109, %v1128
        %v1133 = vmul.f32 %v1111, %v1129
        %v1134 = vmul.f32 %v1113, %v1130
        %v1135 = vmul.f32 %v1115, %v1131
        %v1136 = vpack.c.bf16 %v1132, %v1132
        %v1137 = vpack.c.bf16 %v1133, %v1133
        %v1138 = vpack.c.bf16 %v1134, %v1134
        %v1139 = vpack.c.bf16 %v1135, %v1135
        %v1142 = vunpack.c.l.b16 %v1136
        %v1143 = vunpack.c.l.b16 %v1137
        %v1144 = vpack.c.b16 %v1143, %v1142
        %1145 = vrot.lane.b32.xlu0 %v843, 96
        %v1146 = vpop.permute.xlu0 %1145
        %v1149 = vsel %vm725, %v1144, 0
        %1151 = vmatpush.bf16.msra.mxu0 0
        %1152 = vmatpush.bf16.msra.mxu0 0
        %1153 = vmatpush.bf16.msra.mxu0 0
        %1154 = vmatpush.bf16.msra.mxu0 0
        %1155 = vmatpush.bf16.msra.mxu0 0
        %1156 = vmatpush.bf16.msra.mxu0 0
        %1157 = vmatpush.bf16.msra.mxu0 0
        %1158 = vmatpush.bf16.msra.mxu0 %v1146
        %1159 = vmatmul.bf16.gmra.mxu0 %v1149
        %v1160 = vpop.f32.mrf.mxu0
        %v1161 = vadd.f32 0.0, %v1160
        %v1162 = vpop.f32.mrf.mxu0
        %v1163 = vadd.f32 0.0, %v1162
        %1164 = vdwg.mxu0
        %v1167 = vunpack.c.l.b16 %v1138
        %v1168 = vunpack.c.l.b16 %v1139
        %v1169 = vpack.c.b16 %v1168, %v1167
        %1170 = vrot.lane.b32.xlu0 %v871, 96
        %v1171 = vpop.permute.xlu0 %1170
        %v1174 = vsel %vm725, %v1169, 0
        %1176 = vmatpush.bf16.msra.mxu0 0
        %1177 = vmatpush.bf16.msra.mxu0 0
        %1178 = vmatpush.bf16.msra.mxu0 0
        %1179 = vmatpush.bf16.msra.mxu0 0
        %1180 = vmatpush.bf16.msra.mxu0 0
        %1181 = vmatpush.bf16.msra.mxu0 0
        %1182 = vmatpush.bf16.msra.mxu0 0
        %1183 = vmatpush.bf16.msra.mxu0 %v1171
        %1184 = vmatmul.bf16.gmra.mxu0 %v1174
        %v1185 = vpop.f32.mrf.mxu0
        %v1186 = vadd.f32 0.0, %v1185
        %v1187 = vpop.f32.mrf.mxu0
        %v1188 = vadd.f32 0.0, %v1187
        %1189 = vdwg.mxu0
        %1190 = vrot.lane.b32.xlu0 %v717, 80
        %v1191 = vpop.permute.xlu0 %1190
        %1192 = vrot.lane.b32.xlu0 %v722, 16
        %v1193 = vpop.permute.xlu0 %1192
        %v1195 = vsel %vm725, %v1191, 0
        %v1198 = vsel %vm725, %v1193, 0
        %1200 = vmatpush.bf16.xpose.msra.mxu0 0
        %1201 = vmatpush.bf16.xpose.msra.mxu0 0
        %1202 = vmatpush.bf16.xpose.msra.mxu0 0
        %1203 = vmatpush.bf16.xpose.msra.mxu0 0
        %1204 = vmatpush.bf16.xpose.msra.mxu0 0
        %1205 = vmatpush.bf16.xpose.msra.mxu0 0
        %1206 = vmatpush.bf16.xpose.msra.mxu0 0
        %1207 = vmatpush.bf16.xpose.msra.mxu0 %v1198
        %1208 = vmatmul.bf16.gmra.mxu0 %v1195
        %v1209 = vpop.f32.mrf.mxu0
        %v1210 = vadd.f32 0.0, %v1209
        %v1211 = vpop.f32.mrf.mxu0
        %v1212 = vadd.f32 0.0, %v1211
        %1213 = vdwg.mxu0
        %1214 = vrot.lane.b32.xlu0 %v750, 80
        %v1215 = vpop.permute.xlu0 %1214
        %1216 = vrot.lane.b32.xlu0 %v755, 16
        %v1217 = vpop.permute.xlu0 %1216
        %v1219 = vsel %vm725, %v1215, 0
        %v1222 = vsel %vm725, %v1217, 0
        %1224 = vmatpush.bf16.xpose.msra.mxu0 0
        %1225 = vmatpush.bf16.xpose.msra.mxu0 0
        %1226 = vmatpush.bf16.xpose.msra.mxu0 0
        %1227 = vmatpush.bf16.xpose.msra.mxu0 0
        %1228 = vmatpush.bf16.xpose.msra.mxu0 0
        %1229 = vmatpush.bf16.xpose.msra.mxu0 0
        %1230 = vmatpush.bf16.xpose.msra.mxu0 0
        %1231 = vmatpush.bf16.xpose.msra.mxu0 %v1222
        %1232 = vmatmul.bf16.gmra.mxu0 %v1219
        %v1233 = vpop.f32.mrf.mxu0
        %v1234 = vadd.f32 0.0, %v1233
        %v1235 = vpop.f32.mrf.mxu0
        %v1236 = vadd.f32 0.0, %v1235
        %1237 = vdwg.mxu0
        %v1238 = vsel %vm780, %v1210, -1e+30
        %v1239 = vsel %vm781, %v1212, -1e+30
        %v1240 = vsel %vm780, %v1234, -1e+30
        %v1241 = vsel %vm781, %v1236, -1e+30
        %v1242 = vsel %vm725, %v1238, -inf
        %1243 = vmax.xlane.f32.xlu0 %v1242
        %v1244 = vpop.xlane.xlu0 %1243
        %v1245 = vsel %vm725, %v1239, -inf
        %1246 = vmax.xlane.f32.xlu0 %v1245
        %v1247 = vpop.xlane.xlu0 %1246
        %v1248 = vsel %vm725, %v1240, -inf
        %1249 = vmax.xlane.f32.xlu0 %v1248
        %v1250 = vpop.xlane.xlu0 %1249
        %v1251 = vsel %vm725, %v1241, -inf
        %1252 = vmax.xlane.f32.xlu0 %v1251
        %v1253 = vpop.xlane.xlu0 %1252
        %v1254 = vsub.f32 %v1238, %v1244
        %v1255 = vsub.f32 %v1239, %v1247
        %v1256 = vsub.f32 %v1240, %v1250
        %v1257 = vsub.f32 %v1241, %v1253
        %v1258 = vmul.f32 %v1254, 1.442695
        %v1259 = vpow.pop %v1258
        %v1260 = vmul.f32 %v1255, 1.442695
        %v1261 = vpow.pop %v1260
        %v1262 = vmul.f32 %v1256, 1.442695
        %v1263 = vpow.pop %v1262
        %v1264 = vmul.f32 %v1257, 1.442695
        %v1265 = vpow.pop %v1264
        %v1266 = vsel %vm725, %v1259, 0.0
        %1267 = vadd.xlane.f32.xlu0 %v1266
        %v1268 = vpop.xlane.xlu0 %1267
        %v1269 = vsel %vm725, %v1261, 0.0
        %1270 = vadd.xlane.f32.xlu0 %v1269
        %v1271 = vpop.xlane.xlu0 %1270
        %v1272 = vsel %vm725, %v1263, 0.0
        %1273 = vadd.xlane.f32.xlu0 %v1272
        %v1274 = vpop.xlane.xlu0 %1273
        %v1275 = vsel %vm725, %v1265, 0.0
        %1276 = vadd.xlane.f32.xlu0 %v1275
        %v1277 = vpop.xlane.xlu0 %1276
        %v1278 = vrcp.pop %v1268
        %v1279 = vrcp.pop %v1271
        %v1280 = vrcp.pop %v1274
        %v1281 = vrcp.pop %v1277
        %v1282 = vmul.f32 %v1259, %v1278
        %v1283 = vmul.f32 %v1261, %v1279
        %v1284 = vmul.f32 %v1263, %v1280
        %v1285 = vmul.f32 %v1265, %v1281
        %v1286 = vpack.c.bf16 %v1282, %v1282
        %v1287 = vpack.c.bf16 %v1283, %v1283
        %v1288 = vpack.c.bf16 %v1284, %v1284
        %v1289 = vpack.c.bf16 %v1285, %v1285
        %v1292 = vunpack.c.l.b16 %v1286
        %v1293 = vunpack.c.l.b16 %v1287
        %v1294 = vpack.c.b16 %v1293, %v1292
        %1295 = vrot.lane.b32.xlu0 %v843, 80
        %v1296 = vpop.permute.xlu0 %1295
        %v1299 = vsel %vm725, %v1294, 0
        %1301 = vmatpush.bf16.msra.mxu0 0
        %1302 = vmatpush.bf16.msra.mxu0 0
        %1303 = vmatpush.bf16.msra.mxu0 0
        %1304 = vmatpush.bf16.msra.mxu0 0
        %1305 = vmatpush.bf16.msra.mxu0 0
        %1306 = vmatpush.bf16.msra.mxu0 0
        %1307 = vmatpush.bf16.msra.mxu0 0
        %1308 = vmatpush.bf16.msra.mxu0 %v1296
        %1309 = vmatmul.bf16.gmra.mxu0 %v1299
        %v1310 = vpop.f32.mrf.mxu0
        %v1311 = vadd.f32 0.0, %v1310
        %v1312 = vpop.f32.mrf.mxu0
        %v1313 = vadd.f32 0.0, %v1312
        %1314 = vdwg.mxu0
        %v1317 = vunpack.c.l.b16 %v1288
        %v1318 = vunpack.c.l.b16 %v1289
        %v1319 = vpack.c.b16 %v1318, %v1317
        %1320 = vrot.lane.b32.xlu0 %v871, 80
        %v1321 = vpop.permute.xlu0 %1320
        %v1324 = vsel %vm725, %v1319, 0
        %1326 = vmatpush.bf16.msra.mxu0 0
        %1327 = vmatpush.bf16.msra.mxu0 0
        %1328 = vmatpush.bf16.msra.mxu0 0
        %1329 = vmatpush.bf16.msra.mxu0 0
        %1330 = vmatpush.bf16.msra.mxu0 0
        %1331 = vmatpush.bf16.msra.mxu0 0
        %1332 = vmatpush.bf16.msra.mxu0 0
        %1333 = vmatpush.bf16.msra.mxu0 %v1321
        %1334 = vmatmul.bf16.gmra.mxu0 %v1324
        %v1335 = vpop.f32.mrf.mxu0
        %v1336 = vadd.f32 0.0, %v1335
        %v1337 = vpop.f32.mrf.mxu0
        %v1338 = vadd.f32 0.0, %v1337
        %1339 = vdwg.mxu0
        %1344 = vrot.lane.b32.xlu0 %v1011, 16
        %v1345 = vpop.permute.xlu0 %1344
        %1346 = vrot.lane.b32.xlu0 %v1013, 16
        %v1347 = vpop.permute.xlu0 %1346
        %1348 = vrot.lane.b32.xlu0 %v1036, 16
        %v1349 = vpop.permute.xlu0 %1348
        %1350 = vrot.lane.b32.xlu0 %v1038, 16
        %v1351 = vpop.permute.xlu0 %1350
        %1360 = vrot.lane.b32.xlu0 %v1161, 32
        %v1361 = vpop.permute.xlu0 %1360
        %1362 = vrot.lane.b32.xlu0 %v1163, 32
        %v1363 = vpop.permute.xlu0 %1362
        %1364 = vrot.lane.b32.xlu0 %v1186, 32
        %v1365 = vpop.permute.xlu0 %1364
        %1366 = vrot.lane.b32.xlu0 %v1188, 32
        %v1367 = vpop.permute.xlu0 %1366
        %1376 = vrot.lane.b32.xlu0 %v1311, 48
        %v1377 = vpop.permute.xlu0 %1376
        %1378 = vrot.lane.b32.xlu0 %v1313, 48
        %v1379 = vpop.permute.xlu0 %1378
        %1380 = vrot.lane.b32.xlu0 %v1336, 48
        %v1381 = vpop.permute.xlu0 %1380
        %1382 = vrot.lane.b32.xlu0 %v1338, 48
        %v1383 = vpop.permute.xlu0 %1382
        %v1388 = vsel %vm725, %v858, %v1345
        %v1389 = vsel %vm725, %v860, %v1347
        %v1390 = vsel %vm725, %v886, %v1349
        %v1391 = vsel %vm725, %v888, %v1351
        %vm1392 = vcmask 261120
        %v1393 = vsel %vm1392, %v1388, %v1361
        %v1394 = vsel %vm1392, %v1389, %v1363
        %v1395 = vsel %vm1392, %v1390, %v1365
        %v1396 = vsel %vm1392, %v1391, %v1367
        %vm1397 = vcmask 392192
        %v1398 = vsel %vm1397, %v1393, %v1377
        %v1399 = vsel %vm1397, %v1394, %v1379
        %v1400 = vsel %vm1397, %v1395, %v1381
        %v1401 = vsel %vm1397, %v1396, %v1383
        %v1402 = vpack.c.bf16 %v1399, %v1398
        %v1403 = vpack.c.bf16 %v1401, %v1400
        %v1404 = vld [vmem:[#allocation7] sm:$0xf]
        %v1405 = vld [vmem:[#allocation7 + $0x4] sm:$0xf]
        %v1406 = vld [vmem:[#allocation7 + $0x8] sm:$0xf]
        %v1407 = vld [vmem:[#allocation7 + $0xc] sm:$0xf]
        %v1408 = vld [vmem:[#allocation7 + $0x10] sm:$0xf]
        %v1409 = vld [vmem:[#allocation7 + $0x14] sm:$0xf]
        %v1410 = vld [vmem:[#allocation7 + $0x18] sm:$0xf]
        %v1411 = vld [vmem:[#allocation7 + $0x1c] sm:$0xf]
        %v1412 = vld [vmem:[#allocation8] sm:$0x1]
        %v1414 = vperm.slane %v1412, 0
        %v1424 = vunpack.c.l.b16 %v1404
        %v1425 = vunpack.c.l.b16 %v1405
        %v1426 = vunpack.c.l.b16 %v1406
        %v1427 = vunpack.c.l.b16 %v1407
        %v1428 = vunpack.c.l.b16 %v1408
        %v1429 = vunpack.c.l.b16 %v1409
        %v1430 = vunpack.c.l.b16 %v1410
        %v1431 = vunpack.c.l.b16 %v1411
        %v1432 = vpack.c.b16 %v1425, %v1424
        %v1433 = vpack.c.b16 %v1427, %v1426
        %v1434 = vpack.c.b16 %v1429, %v1428
        %v1435 = vpack.c.b16 %v1431, %v1430
        %v1441 = vsel %vm486, %v1402, 0
        %v1444 = vsel %vm486, %v1403, 0
        %1446 = vmatpush.bf16.msra.mxu0 0
        %1447 = vmatpush.bf16.msra.mxu0 0
        %1448 = vmatpush.bf16.msra.mxu0 0
        %1449 = vmatpush.bf16.msra.mxu0 0
        %1450 = vmatpush.bf16.msra.mxu0 %v1435
        %1451 = vmatpush.bf16.msra.mxu0 %v1434
        %1452 = vmatpush.bf16.msra.mxu0 %v1433
        %1453 = vmatpush.bf16.msra.mxu0 %v1432
        %1454 = vmatmul.bf16.gmra.mxu0 %v1441
        %v1455 = vpop.f32.mrf.mxu0
        %v1456 = vadd.f32 %v1414, %v1455
        %v1457 = vpop.f32.mrf.mxu0
        %v1458 = vadd.f32 %v1414, %v1457
        %1459 = vmatmul.bf16.gmra.mxu0 %v1444
        %v1460 = vpop.f32.mrf.mxu0
        %v1461 = vadd.f32 %v1414, %v1460
        %v1462 = vpop.f32.mrf.mxu0
        %v1463 = vadd.f32 %v1414, %v1462
        %1464 = vdwg.mxu0
        %v1465 = vadd.f32 %v480, %v1456
        %v1466 = vadd.f32 %v481, %v1458
        %v1467 = vadd.f32 %v482, %v1461
        %v1468 = vadd.f32 %v483, %v1463
        %v1469 = vld [vmem:[%s6] sm:$0x1]
        %v1470 = vld [vmem:[%s7] sm:$0x1]
        %v1471 = vsel %vm486, %v1465, 0.0
        %1472 = vadd.xlane.f32.xlu0 %v1471
        %v1473 = vpop.xlane.xlu0 %1472
        %v1474 = vsel %vm486, %v1466, 0.0
        %1475 = vadd.xlane.f32.xlu0 %v1474
        %v1476 = vpop.xlane.xlu0 %1475
        %v1477 = vsel %vm486, %v1467, 0.0
        %1478 = vadd.xlane.f32.xlu0 %v1477
        %v1479 = vpop.xlane.xlu0 %1478
        %v1480 = vsel %vm486, %v1468, 0.0
        %1481 = vadd.xlane.f32.xlu0 %v1480
        %v1482 = vpop.xlane.xlu0 %1481
        %v1483 = vmul.f32 %v1473, %v505
        %v1484 = vmul.f32 %v1476, %v505
        %v1485 = vmul.f32 %v1479, %v505
        %v1486 = vmul.f32 %v1482, %v505
        %v1487 = vsub.f32 %v1465, %v1483
        %v1488 = vsub.f32 %v1466, %v1484
        %v1489 = vsub.f32 %v1467, %v1485
        %v1490 = vsub.f32 %v1468, %v1486
        %v1491 = vmul.f32 %v1487, %v1487
        %v1492 = vmul.f32 %v1488, %v1488
        %v1493 = vmul.f32 %v1489, %v1489
        %v1494 = vmul.f32 %v1490, %v1490
        %v1495 = vsel %vm486, %v1491, 0.0
        %1496 = vadd.xlane.f32.xlu0 %v1495
        %v1497 = vpop.xlane.xlu0 %1496
        %v1498 = vsel %vm486, %v1492, 0.0
        %1499 = vadd.xlane.f32.xlu0 %v1498
        %v1500 = vpop.xlane.xlu0 %1499
        %v1501 = vsel %vm486, %v1493, 0.0
        %1502 = vadd.xlane.f32.xlu0 %v1501
        %v1503 = vpop.xlane.xlu0 %1502
        %v1504 = vsel %vm486, %v1494, 0.0
        %1505 = vadd.xlane.f32.xlu0 %v1504
        %v1506 = vpop.xlane.xlu0 %1505
        %v1507 = vmul.f32 %v1497, %v505
        %v1508 = vmul.f32 %v1500, %v505
        %v1509 = vmul.f32 %v1503, %v505
        %v1510 = vmul.f32 %v1506, %v505
        %v1511 = vadd.f32 %v1507, 1e-05
        %v1512 = vadd.f32 %v1508, 1e-05
        %v1513 = vadd.f32 %v1509, 1e-05
        %v1514 = vadd.f32 %v1510, 1e-05
        %v1515 = vrsqrt.pop %v1511
        %v1516 = vmul.f32 %v1515, %v1511
        %v1517 = vmul.f32 %v1516, %v1515
        %v1518 = vmul.f32 0.5, %v1517
        %v1519 = vsub.f32 1.5, %v1518
        %v1520 = vmul.f32 %v1515, %v1519
        %vm1521 = vweird.f32 %v1511
        %vm1522 = vweird.f32 %v1515
        %vm1523 = vmor %vm1521, %vm1522
        %v1524 = vsel %vm1523, %v1515, %v1520
        %v1525 = vrsqrt.pop %v1512
        %v1526 = vmul.f32 %v1525, %v1512
        %v1527 = vmul.f32 %v1526, %v1525
        %v1528 = vmul.f32 0.5, %v1527
        %v1529 = vsub.f32 1.5, %v1528
        %v1530 = vmul.f32 %v1525, %v1529
        %vm1531 = vweird.f32 %v1512
        %vm1532 = vweird.f32 %v1525
        %vm1533 = vmor %vm1531, %vm1532
        %v1534 = vsel %vm1533, %v1525, %v1530
        %v1535 = vrsqrt.pop %v1513
        %v1536 = vmul.f32 %v1535, %v1513
        %v1537 = vmul.f32 %v1536, %v1535
        %v1538 = vmul.f32 0.5, %v1537
        %v1539 = vsub.f32 1.5, %v1538
        %v1540 = vmul.f32 %v1535, %v1539
        %vm1541 = vweird.f32 %v1513
        %vm1542 = vweird.f32 %v1535
        %vm1543 = vmor %vm1541, %vm1542
        %v1544 = vsel %vm1543, %v1535, %v1540
        %v1545 = vrsqrt.pop %v1514
        %v1546 = vmul.f32 %v1545, %v1514
        %v1547 = vmul.f32 %v1546, %v1545
        %v1548 = vmul.f32 0.5, %v1547
        %v1549 = vsub.f32 1.5, %v1548
        %v1550 = vmul.f32 %v1545, %v1549
        %vm1551 = vweird.f32 %v1514
        %vm1552 = vweird.f32 %v1545
        %vm1553 = vmor %vm1551, %vm1552
        %v1554 = vsel %vm1553, %v1545, %v1550
        %v1555 = vmul.f32 %v1487, %v1524
        %v1556 = vmul.f32 %v1488, %v1534
        %v1557 = vmul.f32 %v1489, %v1544
        %v1558 = vmul.f32 %v1490, %v1554
        %v1560 = vperm.slane %v1469, 0
        %v1562 = vmul.f32 %v1555, %v1560
        %v1563 = vmul.f32 %v1556, %v1560
        %v1564 = vmul.f32 %v1557, %v1560
        %v1565 = vmul.f32 %v1558, %v1560
        %v1567 = vperm.slane %v1470, 0
        %v1569 = vadd.f32 %v1562, %v1567
        %v1570 = vadd.f32 %v1563, %v1567
        %v1571 = vadd.f32 %v1564, %v1567
        %v1572 = vadd.f32 %v1565, %v1567
        %v1573 = vpack.c.bf16 %v1570, %v1569
        %v1574 = vpack.c.bf16 %v1572, %v1571
        %v1575 = vld [vmem:[%s8] sm:$0xff]
        %v1576 = vld [vmem:[%s8 + $0x8] sm:$0xff]
        %v1577 = vld [vmem:[%s8 + $0x10] sm:$0xff]
        %v1578 = vld [vmem:[%s8 + $0x18] sm:$0xff]
        %v1579 = vld [vmem:[%s8 + $0x20] sm:$0xff]
        %v1580 = vld [vmem:[%s8 + $0x28] sm:$0xff]
        %v1581 = vld [vmem:[%s8 + $0x30] sm:$0xff]
        %v1582 = vld [vmem:[%s8 + $0x38] sm:$0xff]
        %v1583 = vld [vmem:[%s9] sm:$0x3]
        %v1585 = vperm.slane %v1583, 0
        %v1586 = vperm.slane %v1583, 1
        %v1597 = vunpack.c.l.b16 %v1575
        %v1598 = vunpack.c.h.b16 %v1575
        %v1599 = vunpack.c.l.b16 %v1576
        %v1600 = vunpack.c.h.b16 %v1576
        %v1601 = vunpack.c.l.b16 %v1577
        %v1602 = vunpack.c.h.b16 %v1577
        %v1603 = vunpack.c.l.b16 %v1578
        %v1604 = vunpack.c.h.b16 %v1578
        %v1605 = vunpack.c.l.b16 %v1579
        %v1606 = vunpack.c.h.b16 %v1579
        %v1607 = vunpack.c.l.b16 %v1580
        %v1608 = vunpack.c.h.b16 %v1580
        %v1609 = vunpack.c.l.b16 %v1581
        %v1610 = vunpack.c.h.b16 %v1581
        %v1611 = vunpack.c.l.b16 %v1582
        %v1612 = vunpack.c.h.b16 %v1582
        %v1613 = vpack.c.b16 %v1599, %v1597
        %v1614 = vpack.c.b16 %v1600, %v1598
        %v1615 = vpack.c.b16 %v1603, %v1601
        %v1616 = vpack.c.b16 %v1604, %v1602
        %v1617 = vpack.c.b16 %v1607, %v1605
        %v1618 = vpack.c.b16 %v1608, %v1606
        %v1619 = vpack.c.b16 %v1611, %v1609
        %v1620 = vpack.c.b16 %v1612, %v1610
        %v1630 = vsel %vm486, %v1573, 0
        %v1633 = vsel %vm486, %v1574, 0
        %1635 = vmatpush.bf16.msra.mxu0 0
        %1636 = vmatpush.bf16.msra.mxu0 0
        %1637 = vmatpush.bf16.msra.mxu0 0
        %1638 = vmatpush.bf16.msra.mxu0 0
        %1639 = vmatpush.bf16.msra.mxu0 %v1619
        %1640 = vmatpush.bf16.msra.mxu0 %v1617
        %1641 = vmatpush.bf16.msra.mxu0 %v1615
        %1642 = vmatpush.bf16.msra.mxu0 %v1613
        %1643 = vmatmul.bf16.gmra.mxu0 %v1630
        %v1644 = vpop.f32.mrf.mxu0
        %v1645 = vadd.f32 %v1585, %v1644
        %v1646 = vpop.f32.mrf.mxu0
        %v1647 = vadd.f32 %v1585, %v1646
        %1648 = vmatmul.bf16.gmra.mxu0 %v1633
        %v1649 = vpop.f32.mrf.mxu0
        %v1650 = vadd.f32 %v1585, %v1649
        %v1651 = vpop.f32.mrf.mxu0
        %v1652 = vadd.f32 %v1585, %v1651
        %1653 = vdwg.mxu0
        %1654 = vmatpush.bf16.msra.mxu0 0
        %1655 = vmatpush.bf16.msra.mxu0 0
        %1656 = vmatpush.bf16.msra.mxu0 0
        %1657 = vmatpush.bf16.msra.mxu0 0
        %1658 = vmatpush.bf16.msra.mxu0 %v1620
        %1659 = vmatpush.bf16.msra.mxu0 %v1618
        %1660 = vmatpush.bf16.msra.mxu0 %v1616
        %1661 = vmatpush.bf16.msra.mxu0 %v1614
        %1662 = vmatmul.bf16.gmra.mxu0 %v1630
        %v1663 = vpop.f32.mrf.mxu0
        %v1664 = vadd.f32 %v1586, %v1663
        %v1665 = vpop.f32.mrf.mxu0
        %v1666 = vadd.f32 %v1586, %v1665
        %1667 = vmatmul.bf16.gmra.mxu0 %v1633
        %v1668 = vpop.f32.mrf.mxu0
        %v1669 = vadd.f32 %v1586, %v1668
        %v1670 = vpop.f32.mrf.mxu0
        %v1671 = vadd.f32 %v1586, %v1670
        %1672 = vdwg.mxu0
        %v1673 = vmax.f32 %v1645, 0.0
        %v1674 = vmax.f32 %v1664, 0.0
        %v1675 = vmax.f32 %v1647, 0.0
        %v1676 = vmax.f32 %v1666, 0.0
        %v1677 = vmax.f32 %v1650, 0.0
        %v1678 = vmax.f32 %v1669, 0.0
        %v1679 = vmax.f32 %v1652, 0.0
        %v1680 = vmax.f32 %v1671, 0.0
        %v1681 = vpack.c.bf16 %v1675, %v1673
        %v1682 = vpack.c.bf16 %v1676, %v1674
        %v1683 = vpack.c.bf16 %v1679, %v1677
        %v1684 = vpack.c.bf16 %v1680, %v1678
        %v1685 = vld [vmem:[%s10] sm:$0xf]
        %v1686 = vld [vmem:[%s10 + $0x4] sm:$0xf]
        %v1687 = vld [vmem:[%s10 + $0x8] sm:$0xf]
        %v1688 = vld [vmem:[%s10 + $0xc] sm:$0xf]
        %v1689 = vld [vmem:[%s10 + $0x10] sm:$0xf]
        %v1690 = vld [vmem:[%s10 + $0x14] sm:$0xf]
        %v1691 = vld [vmem:[%s10 + $0x18] sm:$0xf]
        %v1692 = vld [vmem:[%s10 + $0x1c] sm:$0xf]
        %v1693 = vld [vmem:[%s10 + $0x20] sm:$0xf]
        %v1694 = vld [vmem:[%s10 + $0x24] sm:$0xf]
        %v1695 = vld [vmem:[%s10 + $0x28] sm:$0xf]
        %v1696 = vld [vmem:[%s10 + $0x2c] sm:$0xf]
        %v1697 = vld [vmem:[%s10 + $0x30] sm:$0xf]
        %v1698 = vld [vmem:[%s10 + $0x34] sm:$0xf]
        %v1699 = vld [vmem:[%s10 + $0x38] sm:$0xf]
        %v1700 = vld [vmem:[%s10 + $0x3c] sm:$0xf]
        %v1701 = vld [vmem:[%s10 + $0x40] sm:$0xf]
        %v1702 = vld [vmem:[%s10 + $0x44] sm:$0xf]
        %v1703 = vld [vmem:[%s10 + $0x48] sm:$0xf]
        %v1704 = vld [vmem:[%s10 + $0x4c] sm:$0xf]
        %v1705 = vld [vmem:[%s10 + $0x50] sm:$0xf]
        %v1706 = vld [vmem:[%s10 + $0x54] sm:$0xf]
        %v1707 = vld [vmem:[%s10 + $0x58] sm:$0xf]
        %v1708 = vld [vmem:[%s10 + $0x5c] sm:$0xf]
        %v1709 = vld [vmem:[%s10 + $0x60] sm:$0xf]
        %v1710 = vld [vmem:[%s10 + $0x64] sm:$0xf]
        %v1711 = vld [vmem:[%s10 + $0x68] sm:$0xf]
        %v1712 = vld [vmem:[%s10 + $0x6c] sm:$0xf]
        %v1713 = vld [vmem:[%s10 + $0x70] sm:$0xf]
        %v1714 = vld [vmem:[%s10 + $0x74] sm:$0xf]
        %v1715 = vld [vmem:[%s10 + $0x78] sm:$0xf]
        %v1716 = vld [vmem:[%s10 + $0x7c] sm:$0xf]
        %v1717 = vld [vmem:[%s11] sm:$0x1]
        %v1719 = vperm.slane %v1717, 0
        %v1753 = vunpack.c.l.b16 %v1685
        %v1754 = vunpack.c.l.b16 %v1686
        %v1755 = vunpack.c.l.b16 %v1687
        %v1756 = vunpack.c.l.b16 %v1688
        %v1757 = vunpack.c.l.b16 %v1689
        %v1758 = vunpack.c.l.b16 %v1690
        %v1759 = vunpack.c.l.b16 %v1691
        %v1760 = vunpack.c.l.b16 %v1692
        %v1761 = vunpack.c.l.b16 %v1693
        %v1762 = vunpack.c.l.b16 %v1694
        %v1763 = vunpack.c.l.b16 %v1695
        %v1764 = vunpack.c.l.b16 %v1696
        %v1765 = vunpack.c.l.b16 %v1697
        %v1766 = vunpack.c.l.b16 %v1698
        %v1767 = vunpack.c.l.b16 %v1699
        %v1768 = vunpack.c.l.b16 %v1700
        %v1769 = vunpack.c.l.b16 %v1701
        %v1770 = vunpack.c.l.b16 %v1702
        %v1771 = vunpack.c.l.b16 %v1703
        %v1772 = vunpack.c.l.b16 %v1704
        %v1773 = vunpack.c.l.b16 %v1705
        %v1774 = vunpack.c.l.b16 %v1706
        %v1775 = vunpack.c.l.b16 %v1707
        %v1776 = vunpack.c.l.b16 %v1708
        %v1777 = vunpack.c.l.b16 %v1709
        %v1778 = vunpack.c.l.b16 %v1710
        %v1779 = vunpack.c.l.b16 %v1711
        %v1780 = vunpack.c.l.b16 %v1712
        %v1781 = vunpack.c.l.b16 %v1713
        %v1782 = vunpack.c.l.b16 %v1714
        %v1783 = vunpack.c.l.b16 %v1715
        %v1784 = vunpack.c.l.b16 %v1716
        %v1785 = vpack.c.b16 %v1754, %v1753
        %v1786 = vpack.c.b16 %v1756, %v1755
        %v1787 = vpack.c.b16 %v1758, %v1757
        %v1788 = vpack.c.b16 %v1760, %v1759
        %v1789 = vpack.c.b16 %v1762, %v1761
        %v1790 = vpack.c.b16 %v1764, %v1763
        %v1791 = vpack.c.b16 %v1766, %v1765
        %v1792 = vpack.c.b16 %v1768, %v1767
        %v1793 = vpack.c.b16 %v1770, %v1769
        %v1794 = vpack.c.b16 %v1772, %v1771
        %v1795 = vpack.c.b16 %v1774, %v1773
        %v1796 = vpack.c.b16 %v1776, %v1775
        %v1797 = vpack.c.b16 %v1778, %v1777
        %v1798 = vpack.c.b16 %v1780, %v1779
        %v1799 = vpack.c.b16 %v1782, %v1781
        %v1800 = vpack.c.b16 %v1784, %v1783
        %1817 = vmatpush.bf16.msra.mxu0 %v1792
        %1818 = vmatpush.bf16.msra.mxu0 %v1791
        %1819 = vmatpush.bf16.msra.mxu0 %v1790
        %1820 = vmatpush.bf16.msra.mxu0 %v1789
        %1821 = vmatpush.bf16.msra.mxu0 %v1788
        %1822 = vmatpush.bf16.msra.mxu0 %v1787
        %1823 = vmatpush.bf16.msra.mxu0 %v1786
        %1824 = vmatpush.bf16.msra.mxu0 %v1785
        %1825 = vmatmul.bf16.gmra.mxu0 %v1681
        %v1826 = vpop.f32.mrf.mxu0
        %v1827 = vadd.f32 %v1719, %v1826
        %v1828 = vpop.f32.mrf.mxu0
        %v1829 = vadd.f32 %v1719, %v1828
        %1830 = vmatmul.bf16.gmra.mxu0 %v1683
        %v1831 = vpop.f32.mrf.mxu0
        %v1832 = vadd.f32 %v1719, %v1831
        %v1833 = vpop.f32.mrf.mxu0
        %v1834 = vadd.f32 %v1719, %v1833
        %1835 = vdwg.mxu0
        %1836 = vmatpush.bf16.msra.mxu0 %v1800
        %1837 = vmatpush.bf16.msra.mxu0 %v1799
        %1838 = vmatpush.bf16.msra.mxu0 %v1798
        %1839 = vmatpush.bf16.msra.mxu0 %v1797
        %1840 = vmatpush.bf16.msra.mxu0 %v1796
        %1841 = vmatpush.bf16.msra.mxu0 %v1795
        %1842 = vmatpush.bf16.msra.mxu0 %v1794
        %1843 = vmatpush.bf16.msra.mxu0 %v1793
        %1844 = vmatmul.bf16.gmra.mxu0 %v1682
        %v1845 = vpop.f32.mrf.mxu0
        %v1846 = vadd.f32 %v1827, %v1845
        %v1847 = vpop.f32.mrf.mxu0
        %v1848 = vadd.f32 %v1829, %v1847
        %1849 = vmatmul.bf16.gmra.mxu0 %v1684
        %v1850 = vpop.f32.mrf.mxu0
        %v1851 = vadd.f32 %v1832, %v1850
        %v1852 = vpop.f32.mrf.mxu0
        %v1853 = vadd.f32 %v1834, %v1852
        %1854 = vdwg.mxu0
        %v1855 = vadd.f32 %v1465, %v1846
        %v1856 = vadd.f32 %v1466, %v1848
        %v1857 = vadd.f32 %v1467, %v1851
        %v1858 = vadd.f32 %v1468, %v1853
        %1859 = vst.msk [vmem:[%s470] sm:$0xff] %vm486, %v1855
        %1860 = vst.msk [vmem:[%s470 + $0x8] sm:$0xff] %vm486, %v1856
        %1861 = vst.msk [vmem:[%s470 + $0x10] sm:$0xff] %vm486, %v1857
        %1862 = vst.msk [vmem:[%s470 + $0x18] sm:$0xff] %vm486, %v1858
        %s1863 = sand.u32 %s294, 1
        %s1864 = scalar_lea.sflag [#allocation4], %s1863
        %s1865 = sand.u32 %s294, 1
        %s1866 = smul.addr %s1865, 32
        %s1867 = scalar_lea.vmem [#allocation10], %s1866
        // Predicated region
        $region85: #{tpu_custom_call.1} parent=67 // pred_check
          %p1868 = pneg %p304
        $region86: #{tpu_custom_call.1} parent=67 // pred_check_branch
          %1870 = sbr.rel (%p1868) target = $region88
        $region87: #{tpu_custom_call.1} parent=67 // pred_region
          %s1871 = smul.u32 2, %s29
          %1873 = vsyncadd %s1864, 0
          %s1874 = smul.addr %s1871, 2
          %s1875 = smul.addr %s1874, 8
          %s1876 = scalar_lea.hbm %s12, %s1875
          %s1877 = sshll.u32 %s1867, 4
          %s1878 = int_to_ptr.vmem [resolvable:$true] %s1877
          %s1879 = sshll.u32 %s1876, 4
          %s1880 = int_to_ptr.hbm [resolvable:$true] %s1879
          %1885 = dma.vmem_to_hbm [thread:$0]  %s1878, 512, %s1880, %s1864, 128, 128, 8
        $region88: #{tpu_custom_call.1} parent=67 // pred_fallthru
          _
      $region68: #{tpu_custom_call.1} parent=5 // pred_fallthru
        _
      %p1886 = scmp.le.s32.totalorder 2, %s24
      // Predicated region
      $region89: #{tpu_custom_call.1} parent=5 // pred_check
        %p1887 = pneg %p1886
      $region90: #{tpu_custom_call.1} parent=5 // pred_check_branch
        %1889 = sbr.rel (%p1887) target = $region92
      $region91: #{tpu_custom_call.1} parent=5 // pred_region
        %s1890 = ssub.s32 %s24, 2
        // Predicated region
        $region93: #{tpu_custom_call.1} parent=91 // pred_check
          %p1891 = pneg %p310
        $region94: #{tpu_custom_call.1} parent=91 // pred_check_branch
          %1893 = sbr.rel (%p1891) target = $region96
        $region95: #{tpu_custom_call.1} parent=91 // pred_region
          %s1894 = sand.u32 %s295, 1
          %s1895 = scalar_lea.sflag [#allocation4], %s1894
          %s1896 = sand.u32 %s295, 1
          %s1897 = smul.addr %s1896, 32
          %s1898 = scalar_lea.vmem [#allocation10], %s1897
          %1900 = dma.done %s1895, 512
        $region96: #{tpu_custom_call.1} parent=91 // pred_fallthru
          _
      $region92: #{tpu_custom_call.1} parent=5 // pred_fallthru
        _
    $region6: #{tpu_custom_call.1} parent=1 // loop_footer
      %s28 = sadd.s32 1, %s24
    $region7: #{tpu_custom_call.1} parent=1 // loop_footer_branch
      %23 = sbr.rel target = $region3
    $region8: #{tpu_custom_call.1} parent=1 // loop_exit
      _
    %1901 = vsyncpa [#allocation3], 1
    %s1902 = scalar_lea.sflag [#allocation3], 1
    %1903 = vsyncpa %s1902, 1
    %1904 = vsyncpa [#allocation6], 1
    %1905 = vsyncpa [#allocation9], 1
    %1906 = vsyncpa [#allocation4], 1
    %s1907 = scalar_lea.sflag [#allocation4], 1
    %1908 = vsyncpa %s1907, 1

</llo_original>
